<compile_context>
chip_gen: v6e
topology: v6e:2x2x1
jax: 0.10.0
libtpu: 0.0.40
codegen_flags: <defaults>
</compile_context>

<pallas_src>
import functools

import jax
import jax.numpy as jnp
from jax.experimental import pallas as pl
from jax.experimental.pallas import tpu as pltpu


def _round_up(x, m):
    return (x + m - 1) // m * m


# ---------------------------------------------------------------------------
# Pass 1: conv-as-matmul on the MXU + per-tile partial BN statistics.
# ---------------------------------------------------------------------------
def _matmul_stats_kernel(x_ref, w_ref, y_ref, part_ref):
    # x_ref: (TM, Kp) bf16   w_ref: (Kp, C2p) bf16
    # y_ref: (TM, C2p) bf16  part_ref: (1, 2, C2p) f32
    y = jnp.dot(x_ref[...], w_ref[...], preferred_element_type=jnp.float32)
    y_ref[...] = y.astype(y_ref.dtype)
    s = jnp.sum(y, axis=0, keepdims=True)          # (1, C2p)
    ss = jnp.sum(y * y, axis=0, keepdims=True)     # (1, C2p)
    part_ref[...] = jnp.concatenate([s, ss], axis=0)[None]


# ---------------------------------------------------------------------------
# Pass 2: folded batch-norm affine + SiLU (f32 on the VPU/EUP).
# ---------------------------------------------------------------------------
def _bn_silu_kernel(y_ref, scale_ref, shift_ref, o_ref):
    # y_ref: (TM, C2p) bf16   scale/shift: (1, C2p) f32   o_ref: (TM, C2p) f32
    z = y_ref[...].astype(jnp.float32) * scale_ref[...] + shift_ref[...]
    o_ref[...] = (z * jax.nn.sigmoid(z)).astype(o_ref.dtype)


# ---------------------------------------------------------------------------
# im2col (with k=1/s=1/p=0 fast path that is just a transpose+reshape)
# ---------------------------------------------------------------------------
def _im2col(x, k, s, p):
    """x: (N, C, H, W) -> (N*Ho*Wo, C*k*k); column order (c, ky, kx)."""
    n, c, h, w = x.shape
    ho = (h + 2 * p - k) // s + 1
    wo = (w + 2 * p - k) // s + 1
    if k == 1 and s == 1 and p == 0:
        return x.transpose(0, 2, 3, 1).reshape(n * h * w, c), ho, wo
    # TODO(synk): for k>1 the k*k patch expansion could be moved into the
    # kernel (k*k shifted accumulated matmuls) to avoid the k*k HBM blow-up.
    if p > 0:
        x = jnp.pad(x, ((0, 0), (0, 0), (p, p), (p, p)))
    cols = []
    for ky in range(k):
        for kx in range(k):
            cols.append(x[:, :, ky:ky + s * ho:s, kx:kx + s * wo:s])
    cols = jnp.stack(cols, axis=0)                       # (k*k, N, C, Ho, Wo)
    cols = cols.transpose(1, 3, 4, 2, 0).reshape(n * ho * wo, c * k * k)
    return cols, ho, wo


# ---------------------------------------------------------------------------
# Wrapper: pad -> pass 1 (matmul+stats) -> fold stats -> pass 2 (BN+SiLU)
# ---------------------------------------------------------------------------
@functools.partial(jax.jit, static_argnames=("k", "s", "p", "tm"))
def conv_bn_silu(x, weight, gamma, beta, *, k=1, s=1, p=0, tm=512):
    """Equivalent of Conv(c1, c2, k, s, p).forward(x), NCHW in, f32 NCHW out."""
    n, c1, h, w = x.shape
    c2 = weight.shape[0]
    eps = 1e-5

    cols, ho, wo = _im2col(x.astype(jnp.float32), k, s, p)   # (M, K)
    m_true, kdim = cols.shape

    # Lane-dense / MXU-friendly padding.
    kp = _round_up(max(kdim, 128), 128)
    c2p = _round_up(max(c2, 128), 128)
    tm = min(tm, _round_up(m_true, 128))     # tm stays a multiple of 128
    m_pad = _round_up(m_true, tm)
    n_tiles = m_pad // tm

    # bf16 MXU inputs (f32 accumulation inside the kernel).
    cols_p = jnp.pad(cols.astype(jnp.bfloat16),
                     ((0, m_pad - m_true), (0, kp - kdim)))
    w2d = weight.astype(jnp.float32).reshape(c2, kdim).T      # (K, C2)
    w_p = jnp.pad(w2d.astype(jnp.bfloat16),
                  ((0, kp - kdim), (0, c2p - c2)))
    gamma_p = jnp.ones((c2p,), jnp.float32).at[:c2].set(gamma.astype(jnp.float32))
    beta_p = jnp.zeros((c2p,), jnp.float32).at[:c2].set(beta.astype(jnp.float32))

    # ---- Pass 1: tiled matmul + per-tile sum / sum-of-squares ------------
    y_pad, partials = pl.pallas_call(
        _matmul_stats_kernel,
        out_shape=(
            jax.ShapeDtypeStruct((m_pad, c2p), jnp.bfloat16),
            jax.ShapeDtypeStruct((n_tiles, 2, c2p), jnp.float32),
        ),
        grid=(n_tiles,),
        in_specs=[
            pl.BlockSpec((tm, kp), lambda i: (i, 0)),        # X tile
            pl.BlockSpec((kp, c2p), lambda i: (0, 0)),       # W (grid-invariant)
        ],
        out_specs=(
            pl.BlockSpec((tm, c2p), lambda i: (i, 0)),       # Y tile (bf16)
            pl.BlockSpec((1, 2, c2p), lambda i: (i, 0, 0)),  # per-tile partials
        ),
        compiler_params=pltpu.CompilerParams(
            dimension_semantics=("parallel",)),
    )(cols_p, w_p)

    # ---- Tiny wrapper reduction: global BN stats -> folded scale/shift ---
    # Padded rows of X are zero => contribute nothing; divide by true M.
    mean = partials[:, 0, :].sum(axis=0) / m_true            # (C2p,)
    ex2 = partials[:, 1, :].sum(axis=0) / m_true
    var = ex2 - mean * mean                                  # biased variance
    rstd = jax.lax.rsqrt(var + eps)
    scale = (gamma_p * rstd).reshape(1, c2p)
    shift = (beta_p - mean * gamma_p * rstd).reshape(1, c2p)

    # ---- Pass 2: BN affine + SiLU over Y ----------------------------------
    z_pad = pl.pallas_call(
        _bn_silu_kernel,
        out_shape=jax.ShapeDtypeStruct((m_pad, c2p), jnp.float32),
        grid=(n_tiles,),
        in_specs=[
            pl.BlockSpec((tm, c2p), lambda i: (i, 0)),       # Y tile
            pl.BlockSpec((1, c2p), lambda i: (0, 0)),        # scale (resident)
            pl.BlockSpec((1, c2p), lambda i: (0, 0)),        # shift (resident)
        ],
        out_specs=pl.BlockSpec((tm, c2p), lambda i: (i, 0)),
        compiler_params=pltpu.CompilerParams(
            dimension_semantics=("parallel",)),
    )(y_pad, scale, shift)

    # Drop padding, back to NCHW.
    out = z_pad[:m_true, :c2].reshape(n, ho, wo, c2).transpose(0, 3, 1, 2)
    return out


# ---------------------------------------------------------------------------
# Pure-JAX reference (f32 everywhere) for a sanity check
# ---------------------------------------------------------------------------
def _reference(x, weight, gamma, beta, k, s, p):
    y = jax.lax.conv_general_dilated(
        x.astype(jnp.float32), weight.astype(jnp.float32),
        window_strides=(s, s), padding=[(p, p), (p, p)],
        dimension_numbers=("NCHW", "OIHW", "NCHW"))
    mean = jnp.mean(y, axis=(0, 2, 3), keepdims=True)
    var = jnp.mean((y - mean) ** 2, axis=(0, 2, 3), keepdims=True)
    z = (y - mean) * jax.lax.rsqrt(var + 1e-5)
    z = z * gamma.reshape(1, -1, 1, 1) + beta.reshape(1, -1, 1, 1)
    return z * jax.nn.sigmoid(z)


if __name__ == "__main__":
    key = jax.random.PRNGKey(0)
    kx, kw, kg, kb = jax.random.split(key, 4)

    n, c1, c2, h, w = 2, 4, 8, 16, 16
    x = jax.random.normal(kx, (n, c1, h, w), dtype=jnp.float32)
    gamma = 1.0 + 0.1 * jax.random.normal(kg, (c2,), dtype=jnp.float32)
    beta = 0.1 * jax.random.normal(kb, (c2,), dtype=jnp.float32)

    # Config 1: module defaults Conv(c1, c2)  (k=1, s=1, p=0).
    k1, s1, p1 = 1, 1, 0
    w1 = jax.random.normal(kw, (c2, c1, k1, k1), dtype=jnp.float32) * 0.1
    out1 = jax.block_until_ready(conv_bn_silu(x, w1, gamma, beta, k=k1, s=s1, p=p1))
    ref1 = _reference(x, w1, gamma, beta, k1, s1, p1)
    assert out1.shape == (n, c2, h, w)
    assert jnp.allclose(out1, ref1, atol=5e-2, rtol=5e-2), "mismatch (k=1)"

    # Config 2: 3x3, same padding (exercises the general im2col path).
    k3, s3, p3 = 3, 1, 1
    w3 = jax.random.normal(kw, (c2, c1, k3, k3), dtype=jnp.float32) * 0.1
    out3 = jax.block_until_ready(conv_bn_silu(x, w3, gamma, beta, k=k3, s=s3, p=p3))
    ref3 = _reference(x, w3, gamma, beta, k3, s3, p3)
    assert out3.shape == (n, c2, h, w)
    assert jnp.allclose(out3, ref3, atol=5e-2, rtol=5e-2), "mismatch (k=3)"

    print("KERNEL_OK")
</pallas_src>

<mosaic_0001>
module attributes {stable_mosaic.version = 11 : i64} {
  func.func @_matmul_stats_kernel(%arg0: i32, %arg1: memref<512x128xbf16, #tpu.memory_space<vmem>>, %arg2: memref<128x128xbf16, #tpu.memory_space<vmem>>, %arg3: memref<512x128xbf16, #tpu.memory_space<vmem>>, %arg4: memref<1x2x128xf32, #tpu.memory_space<vmem>>) attributes {dimension_semantics = [#tpu.dimension_semantics<parallel>], iteration_bounds = array<i64: 1>, scalar_prefetch = 0 : i64, scratch_operands = 0 : i64, tpu.core_type = #tpu.core_type<tc>, window_params = [{transform_indices = @transform_0, window_bounds = array<i64: 512, 128>}, {pipeline_mode = #tpu.pipeline_mode<synchronous>, transform_indices = @transform_1, window_bounds = array<i64: 128, 128>}, {transform_indices = @transform_2, window_bounds = array<i64: 512, 128>}, {transform_indices = @transform_3, window_bounds = array<i64: 1, 2, 128>}]} {
    %c0 = arith.constant 0 : index
    %c0_0 = arith.constant 0 : index
    %0 = vector.load %arg1[%c0, %c0_0] : memref<512x128xbf16, #tpu.memory_space<vmem>>, vector<512x128xbf16>
    %c0_1 = arith.constant 0 : index
    %c0_2 = arith.constant 0 : index
    %1 = vector.load %arg2[%c0_1, %c0_2] : memref<128x128xbf16, #tpu.memory_space<vmem>>, vector<128x128xbf16>
    %cst = arith.constant dense<0.000000e+00> : vector<512x128xf32>
    %2 = tpu.matmul %0, %1, %cst {dimension_numbers = #tpu.dot_dimension_numbers<[1], [0], [0], [1], [0, 0, 1, 1], [], []>} : vector<512x128xbf16>, vector<128x128xbf16>, vector<512x128xf32> -> vector<512x128xf32>
    %3 = arith.truncf %2 : vector<512x128xf32> to vector<512x128xbf16>
    %c0_3 = arith.constant 0 : index
    %c0_4 = arith.constant 0 : index
    %4 = vector.load %arg3[%c0_3, %c0_4] : memref<512x128xbf16, #tpu.memory_space<vmem>>, vector<512x128xbf16>
    tpu.vector_store %arg3[%c0_3, %c0_4], %3 {strides = array<i32>} : memref<512x128xbf16, #tpu.memory_space<vmem>>, vector<512x128xbf16>,
    %cst_5 = arith.constant dense<0.000000e+00> : vector<128xf32>
    %5 = vector.multi_reduction <add>, %2, %cst_5 [0] : vector<512x128xf32> to vector<128xf32>
    %6 = vector.shape_cast %5 : vector<128xf32> to vector<1x128xf32>
    %7 = arith.mulf %2, %2 : vector<512x128xf32>
    %cst_6 = arith.constant dense<0.000000e+00> : vector<128xf32>
    %8 = vector.multi_reduction <add>, %7, %cst_6 [0] : vector<512x128xf32> to vector<128xf32>
    %9 = vector.shape_cast %8 : vector<128xf32> to vector<1x128xf32>
    %10 = tpu.concatenate %6, %9 in 0 : vector<1x128xf32>, vector<1x128xf32> -> vector<2x128xf32>
    %11 = vector.shape_cast %10 : vector<2x128xf32> to vector<1x2x128xf32>
    %c0_7 = arith.constant 0 : index
    %c0_8 = arith.constant 0 : index
    %c0_9 = arith.constant 0 : index
    %12 = vector.load %arg4[%c0_7, %c0_8, %c0_9] : memref<1x2x128xf32, #tpu.memory_space<vmem>>, vector<1x2x128xf32>
    tpu.vector_store %arg4[%c0_7, %c0_8, %c0_9], %11 {strides = array<i32>} : memref<1x2x128xf32, #tpu.memory_space<vmem>>, vector<1x2x128xf32>,
    return
  }
  func.func @transform_0(%arg0: i32) -> (i32, i32) {
    %c0_i32 = arith.constant 0 : i32
    %c0_i32_0 = arith.constant 0 : i32
    return %arg0, %c0_i32 : i32, i32
  }
  func.func @transform_1(%arg0: i32) -> (i32, i32) {
    %c0_i32 = arith.constant 0 : i32
    %c0_i32_0 = arith.constant 0 : i32
    %c0_i32_1 = arith.constant 0 : i32
    return %c0_i32, %c0_i32_0 : i32, i32
  }
  func.func @transform_2(%arg0: i32) -> (i32, i32) {
    %c0_i32 = arith.constant 0 : i32
    %c0_i32_0 = arith.constant 0 : i32
    return %arg0, %c0_i32 : i32, i32
  }
  func.func @transform_3(%arg0: i32) -> (i32, i32, i32) {
    %c0_i32 = arith.constant 0 : i32
    %c0_i32_0 = arith.constant 0 : i32
    %c0_i32_1 = arith.constant 0 : i32
    return %arg0, %c0_i32, %c0_i32_0 : i32, i32, i32
  }
}

module attributes {stable_mosaic.version = 11 : i64} {
  func.func @_bn_silu_kernel(%arg0: i32, %arg1: memref<512x128xbf16, #tpu.memory_space<vmem>>, %arg2: memref<1x128xf32, #tpu.memory_space<vmem>>, %arg3: memref<1x128xf32, #tpu.memory_space<vmem>>, %arg4: memref<512x128xf32, #tpu.memory_space<vmem>>) attributes {dimension_semantics = [#tpu.dimension_semantics<parallel>], iteration_bounds = array<i64: 1>, scalar_prefetch = 0 : i64, scratch_operands = 0 : i64, tpu.core_type = #tpu.core_type<tc>, window_params = [{transform_indices = @transform_0, window_bounds = array<i64: 512, 128>}, {pipeline_mode = #tpu.pipeline_mode<synchronous>, transform_indices = @transform_1, window_bounds = array<i64: 1, 128>}, {pipeline_mode = #tpu.pipeline_mode<synchronous>, transform_indices = @transform_2, window_bounds = array<i64: 1, 128>}, {transform_indices = @transform_3, window_bounds = array<i64: 512, 128>}]} {
    %c0 = arith.constant 0 : index
    %c0_0 = arith.constant 0 : index
    %0 = vector.load %arg1[%c0, %c0_0] : memref<512x128xbf16, #tpu.memory_space<vmem>>, vector<512x128xbf16>
    %1 = arith.extf %0 : vector<512x128xbf16> to vector<512x128xf32>
    %c0_1 = arith.constant 0 : index
    %c0_2 = arith.constant 0 : index
    %2 = vector.load %arg2[%c0_1, %c0_2] : memref<1x128xf32, #tpu.memory_space<vmem>>, vector<1x128xf32>
    %3 = vector.broadcast %2 : vector<1x128xf32> to vector<512x128xf32>
    %4 = arith.mulf %1, %3 : vector<512x128xf32>
    %c0_3 = arith.constant 0 : index
    %c0_4 = arith.constant 0 : index
    %5 = vector.load %arg3[%c0_3, %c0_4] : memref<1x128xf32, #tpu.memory_space<vmem>>, vector<1x128xf32>
    %6 = vector.broadcast %5 : vector<1x128xf32> to vector<512x128xf32>
    %7 = arith.addf %4, %6 : vector<512x128xf32>
    %8 = arith.negf %7 : vector<512x128xf32>
    %9 = math.exp %8 : vector<512x128xf32>
    %cst = arith.constant 1.000000e+00 : f32
    %10 = vector.broadcast %cst : f32 to vector<512x128xf32>
    %11 = arith.addf %10, %9 : vector<512x128xf32>
    %12 = arith.divf %10, %11 : vector<512x128xf32>
    %13 = arith.mulf %7, %12 : vector<512x128xf32>
    %c0_5 = arith.constant 0 : index
    %c0_6 = arith.constant 0 : index
    %14 = vector.load %arg4[%c0_5, %c0_6] : memref<512x128xf32, #tpu.memory_space<vmem>>, vector<512x128xf32>
    tpu.vector_store %arg4[%c0_5, %c0_6], %13 {strides = array<i32>} : memref<512x128xf32, #tpu.memory_space<vmem>>, vector<512x128xf32>,
    return
  }
  func.func @transform_0(%arg0: i32) -> (i32, i32) {
    %c0_i32 = arith.constant 0 : i32
    %c0_i32_0 = arith.constant 0 : i32
    return %arg0, %c0_i32 : i32, i32
  }
  func.func @transform_1(%arg0: i32) -> (i32, i32) {
    %c0_i32 = arith.constant 0 : i32
    %c0_i32_0 = arith.constant 0 : i32
    %c0_i32_1 = arith.constant 0 : i32
    return %c0_i32, %c0_i32_0 : i32, i32
  }
  func.func @transform_2(%arg0: i32) -> (i32, i32) {
    %c0_i32 = arith.constant 0 : i32
    %c0_i32_0 = arith.constant 0 : i32
    %c0_i32_1 = arith.constant 0 : i32
    return %c0_i32, %c0_i32_0 : i32, i32
  }
  func.func @transform_3(%arg0: i32) -> (i32, i32) {
    %c0_i32 = arith.constant 0 : i32
    %c0_i32_0 = arith.constant 0 : i32
    return %arg0, %c0_i32 : i32, i32
  }
}

</mosaic_0001>

<llo_original>
// kernel: conv_bn_silu.3
$region0: #{conv_bn_silu.3}
  #allocation0 [shape = 'u32[]', space=smem, size = 0x4, offset = 0x4, fixed_abs, tag = 'smem constant byte address 0x4 - core index']
  #allocation1 [shape = 'u32[144,128]{1,0:T(1,128)}', space=vmem, size = 0x12000, scoped, tag = 'internal scratch']
  %s0 = inlined_call_operand.vmem [shape: bf16[512,128], index: 0, kind: input, shape index: {}]
  %s1 = inlined_call_operand.vmem [shape: f32[1,128], index: 1, kind: input, shape index: {}]
  %s2 = inlined_call_operand.vmem [shape: f32[1,128], index: 2, kind: input, shape index: {}]
  %s3 = inlined_call_operand.vmem [shape: f32[512,128], index: 3, kind: output, shape index: {}]
  %s4 = sld [smem:[#allocation0]]
  $region22: #{conv_bn_silu.3} parent=0
    _
  %s6 = ssub.s32 1, %s4
  %s7 = scalar_select 0, %s6, %s4
  // Predicated region
  $region2: #{conv_bn_silu.3} parent=0 // pred_check
    _
  $region3: #{conv_bn_silu.3} parent=0 // pred_check_branch
    %9 = sbr.rel (0) target = $region5
  $region4: #{conv_bn_silu.3} parent=0 // pred_region
    _
  $region5: #{conv_bn_silu.3} parent=0 // pred_fallthru
    _
  // Predicated region
  $region6: #{conv_bn_silu.3} parent=0 // pred_check
    _
  $region7: #{conv_bn_silu.3} parent=0 // pred_check_branch
    %11 = sbr.rel (0) target = $region9
  $region8: #{conv_bn_silu.3} parent=0 // pred_region
    _
  $region9: #{conv_bn_silu.3} parent=0 // pred_fallthru
    _
  // Predicated region
  $region10: #{conv_bn_silu.3} parent=0 // pred_check
    _
  $region11: #{conv_bn_silu.3} parent=0 // pred_check_branch
    %13 = sbr.rel (0) target = $region13
  $region12: #{conv_bn_silu.3} parent=0 // pred_region
    _
  $region13: #{conv_bn_silu.3} parent=0 // pred_fallthru
    _
  %v14 = vld [vmem:[%s0] sm:$0xf]
  %v15 = vld [vmem:[%s0 + $0x4] sm:$0xf]
  %v16 = vld [vmem:[%s0 + $0x8] sm:$0xf]
  %v17 = vld [vmem:[%s0 + $0xc] sm:$0xf]
  %v18 = vld [vmem:[%s0 + $0x10] sm:$0xf]
  %v19 = vld [vmem:[%s0 + $0x14] sm:$0xf]
  %v20 = vld [vmem:[%s0 + $0x18] sm:$0xf]
  %v21 = vld [vmem:[%s0 + $0x1c] sm:$0xf]
  %v22 = vld [vmem:[%s0 + $0x20] sm:$0xf]
  %v23 = vld [vmem:[%s0 + $0x24] sm:$0xf]
  %v24 = vld [vmem:[%s0 + $0x28] sm:$0xf]
  %v25 = vld [vmem:[%s0 + $0x2c] sm:$0xf]
  %v26 = vld [vmem:[%s0 + $0x30] sm:$0xf]
  %v27 = vld [vmem:[%s0 + $0x34] sm:$0xf]
  %v28 = vld [vmem:[%s0 + $0x38] sm:$0xf]
  %v29 = vld [vmem:[%s0 + $0x3c] sm:$0xf]
  %v30 = vld [vmem:[%s0 + $0x40] sm:$0xf]
  %v31 = vld [vmem:[%s0 + $0x44] sm:$0xf]
  %v32 = vld [vmem:[%s0 + $0x48] sm:$0xf]
  %v33 = vld [vmem:[%s0 + $0x4c] sm:$0xf]
  %v34 = vld [vmem:[%s0 + $0x50] sm:$0xf]
  %v35 = vld [vmem:[%s0 + $0x54] sm:$0xf]
  %v36 = vld [vmem:[%s0 + $0x58] sm:$0xf]
  %v37 = vld [vmem:[%s0 + $0x5c] sm:$0xf]
  %v38 = vld [vmem:[%s0 + $0x60] sm:$0xf]
  %v39 = vld [vmem:[%s0 + $0x64] sm:$0xf]
  %v40 = vld [vmem:[%s0 + $0x68] sm:$0xf]
  %v41 = vld [vmem:[%s0 + $0x6c] sm:$0xf]
  %v42 = vld [vmem:[%s0 + $0x70] sm:$0xf]
  %v43 = vld [vmem:[%s0 + $0x74] sm:$0xf]
  %v44 = vld [vmem:[%s0 + $0x78] sm:$0xf]
  %v45 = vld [vmem:[%s0 + $0x7c] sm:$0xf]
  %v46 = vld [vmem:[%s0 + $0x80] sm:$0xf]
  %v47 = vld [vmem:[%s0 + $0x84] sm:$0xf]
  %v48 = vld [vmem:[%s0 + $0x88] sm:$0xf]
  %v49 = vld [vmem:[%s0 + $0x8c] sm:$0xf]
  %v50 = vld [vmem:[%s0 + $0x90] sm:$0xf]
  %v51 = vld [vmem:[%s0 + $0x94] sm:$0xf]
  %v52 = vld [vmem:[%s0 + $0x98] sm:$0xf]
  %v53 = vld [vmem:[%s0 + $0x9c] sm:$0xf]
  %v54 = vld [vmem:[%s0 + $0xa0] sm:$0xf]
  %v55 = vld [vmem:[%s0 + $0xa4] sm:$0xf]
  %v56 = vld [vmem:[%s0 + $0xa8] sm:$0xf]
  %v57 = vld [vmem:[%s0 + $0xac] sm:$0xf]
  %v58 = vld [vmem:[%s0 + $0xb0] sm:$0xf]
  %v59 = vld [vmem:[%s0 + $0xb4] sm:$0xf]
  %v60 = vld [vmem:[%s0 + $0xb8] sm:$0xf]
  %v61 = vld [vmem:[%s0 + $0xbc] sm:$0xf]
  %v62 = vld [vmem:[%s0 + $0xc0] sm:$0xf]
  %v63 = vld [vmem:[%s0 + $0xc4] sm:$0xf]
  %v64 = vld [vmem:[%s0 + $0xc8] sm:$0xf]
  %v65 = vld [vmem:[%s0 + $0xcc] sm:$0xf]
  %v66 = vld [vmem:[%s0 + $0xd0] sm:$0xf]
  %v67 = vld [vmem:[%s0 + $0xd4] sm:$0xf]
  %v68 = vld [vmem:[%s0 + $0xd8] sm:$0xf]
  %v69 = vld [vmem:[%s0 + $0xdc] sm:$0xf]
  %v70 = vld [vmem:[%s0 + $0xe0] sm:$0xf]
  %v71 = vld [vmem:[%s0 + $0xe4] sm:$0xf]
  %v72 = vld [vmem:[%s0 + $0xe8] sm:$0xf]
  %v73 = vld [vmem:[%s0 + $0xec] sm:$0xf]
  %v74 = vld [vmem:[%s0 + $0xf0] sm:$0xf]
  %v75 = vld [vmem:[%s0 + $0xf4] sm:$0xf]
  %v76 = vld [vmem:[%s0 + $0xf8] sm:$0xf]
  %v77 = vld [vmem:[%s0 + $0xfc] sm:$0xf]
  %v78 = vunpack.c.l.bf16 %v14
  %v79 = vunpack.c.l.bf16 %v15
  %v80 = vunpack.c.l.bf16 %v16
  %v81 = vunpack.c.l.bf16 %v17
  %v82 = vunpack.c.l.bf16 %v18
  %v83 = vunpack.c.l.bf16 %v19
  %v84 = vunpack.c.l.bf16 %v20
  %v85 = vunpack.c.l.bf16 %v21
  %v86 = vunpack.c.l.bf16 %v22
  %v87 = vunpack.c.l.bf16 %v23
  %v88 = vunpack.c.l.bf16 %v24
  %v89 = vunpack.c.l.bf16 %v25
  %v90 = vunpack.c.l.bf16 %v26
  %v91 = vunpack.c.l.bf16 %v27
  %v92 = vunpack.c.l.bf16 %v28
  %v93 = vunpack.c.l.bf16 %v29
  %v94 = vunpack.c.l.bf16 %v30
  %v95 = vunpack.c.l.bf16 %v31
  %v96 = vunpack.c.l.bf16 %v32
  %v97 = vunpack.c.l.bf16 %v33
  %v98 = vunpack.c.l.bf16 %v34
  %v99 = vunpack.c.l.bf16 %v35
  %v100 = vunpack.c.l.bf16 %v36
  %v101 = vunpack.c.l.bf16 %v37
  %v102 = vunpack.c.l.bf16 %v38
  %v103 = vunpack.c.l.bf16 %v39
  %v104 = vunpack.c.l.bf16 %v40
  %v105 = vunpack.c.l.bf16 %v41
  %v106 = vunpack.c.l.bf16 %v42
  %v107 = vunpack.c.l.bf16 %v43
  %v108 = vunpack.c.l.bf16 %v44
  %v109 = vunpack.c.l.bf16 %v45
  %v110 = vunpack.c.l.bf16 %v46
  %v111 = vunpack.c.l.bf16 %v47
  %v112 = vunpack.c.l.bf16 %v48
  %v113 = vunpack.c.l.bf16 %v49
  %v114 = vunpack.c.l.bf16 %v50
  %v115 = vunpack.c.l.bf16 %v51
  %v116 = vunpack.c.l.bf16 %v52
  %v117 = vunpack.c.l.bf16 %v53
  %v118 = vunpack.c.l.bf16 %v54
  %v119 = vunpack.c.l.bf16 %v55
  %v120 = vunpack.c.l.bf16 %v56
  %v121 = vunpack.c.l.bf16 %v57
  %v122 = vunpack.c.l.bf16 %v58
  %v123 = vunpack.c.l.bf16 %v59
  %v124 = vunpack.c.l.bf16 %v60
  %v125 = vunpack.c.l.bf16 %v61
  %v126 = vunpack.c.l.bf16 %v62
  %v127 = vunpack.c.l.bf16 %v63
  %v128 = vunpack.c.l.bf16 %v64
  %v129 = vunpack.c.l.bf16 %v65
  %v130 = vunpack.c.l.bf16 %v66
  %v131 = vunpack.c.l.bf16 %v67
  %v132 = vunpack.c.l.bf16 %v68
  %v133 = vunpack.c.l.bf16 %v69
  %v134 = vunpack.c.l.bf16 %v70
  %v135 = vunpack.c.l.bf16 %v71
  %v136 = vunpack.c.l.bf16 %v72
  %v137 = vunpack.c.l.bf16 %v73
  %v138 = vunpack.c.l.bf16 %v74
  %v139 = vunpack.c.l.bf16 %v75
  %v140 = vunpack.c.l.bf16 %v76
  %v141 = vunpack.c.l.bf16 %v77
  %v142 = vld [vmem:[%s1] sm:$0x1]
  %v144 = vlaneseq
  %v145 = vshrl.u32 %v144, 7
  %v146 = vsub.s32 0, %v145
  %v147 = vrot.slane %v142, %v146
  %v149 = vmul.f32 %v78, %v147
  %v150 = vmul.f32 %v79, %v147
  %v151 = vmul.f32 %v80, %v147
  %v152 = vmul.f32 %v81, %v147
  %v153 = vmul.f32 %v82, %v147
  %v154 = vmul.f32 %v83, %v147
  %v155 = vmul.f32 %v84, %v147
  %v156 = vmul.f32 %v85, %v147
  %v157 = vmul.f32 %v86, %v147
  %v158 = vmul.f32 %v87, %v147
  %v159 = vmul.f32 %v88, %v147
  %v160 = vmul.f32 %v89, %v147
  %v161 = vmul.f32 %v90, %v147
  %v162 = vmul.f32 %v91, %v147
  %v163 = vmul.f32 %v92, %v147
  %v164 = vmul.f32 %v93, %v147
  %v165 = vmul.f32 %v94, %v147
  %v166 = vmul.f32 %v95, %v147
  %v167 = vmul.f32 %v96, %v147
  %v168 = vmul.f32 %v97, %v147
  %v169 = vmul.f32 %v98, %v147
  %v170 = vmul.f32 %v99, %v147
  %v171 = vmul.f32 %v100, %v147
  %v172 = vmul.f32 %v101, %v147
  %v173 = vmul.f32 %v102, %v147
  %v174 = vmul.f32 %v103, %v147
  %v175 = vmul.f32 %v104, %v147
  %v176 = vmul.f32 %v105, %v147
  %v177 = vmul.f32 %v106, %v147
  %v178 = vmul.f32 %v107, %v147
  %v179 = vmul.f32 %v108, %v147
  %v180 = vmul.f32 %v109, %v147
  %v181 = vmul.f32 %v110, %v147
  %v182 = vmul.f32 %v111, %v147
  %v183 = vmul.f32 %v112, %v147
  %v184 = vmul.f32 %v113, %v147
  %v185 = vmul.f32 %v114, %v147
  %v186 = vmul.f32 %v115, %v147
  %v187 = vmul.f32 %v116, %v147
  %v188 = vmul.f32 %v117, %v147
  %v189 = vmul.f32 %v118, %v147
  %v190 = vmul.f32 %v119, %v147
  %v191 = vmul.f32 %v120, %v147
  %v192 = vmul.f32 %v121, %v147
  %v193 = vmul.f32 %v122, %v147
  %v194 = vmul.f32 %v123, %v147
  %v195 = vmul.f32 %v124, %v147
  %v196 = vmul.f32 %v125, %v147
  %v197 = vmul.f32 %v126, %v147
  %v198 = vmul.f32 %v127, %v147
  %v199 = vmul.f32 %v128, %v147
  %v200 = vmul.f32 %v129, %v147
  %v201 = vmul.f32 %v130, %v147
  %v202 = vmul.f32 %v131, %v147
  %v203 = vmul.f32 %v132, %v147
  %v204 = vmul.f32 %v133, %v147
  %v205 = vmul.f32 %v134, %v147
  %v206 = vmul.f32 %v135, %v147
  %v207 = vmul.f32 %v136, %v147
  %v208 = vmul.f32 %v137, %v147
  %v209 = vmul.f32 %v138, %v147
  %v210 = vmul.f32 %v139, %v147
  %v211 = vmul.f32 %v140, %v147
  %v212 = vmul.f32 %v141, %v147
  %v213 = vld [vmem:[%s2] sm:$0x1]
  %v215 = vlaneseq
  %v216 = vshrl.u32 %v215, 7
  %v217 = vsub.s32 0, %v216
  %v218 = vrot.slane %v213, %v217
  %v220 = vadd.f32 %v149, %v218
  %v221 = vadd.f32 %v150, %v218
  %v222 = vadd.f32 %v151, %v218
  %v223 = vadd.f32 %v152, %v218
  %v224 = vadd.f32 %v153, %v218
  %v225 = vadd.f32 %v154, %v218
  %v226 = vadd.f32 %v155, %v218
  %v227 = vadd.f32 %v156, %v218
  %v228 = vadd.f32 %v157, %v218
  %v229 = vadd.f32 %v158, %v218
  %v230 = vadd.f32 %v159, %v218
  %v231 = vadd.f32 %v160, %v218
  %v232 = vadd.f32 %v161, %v218
  %v233 = vadd.f32 %v162, %v218
  %v234 = vadd.f32 %v163, %v218
  %v235 = vadd.f32 %v164, %v218
  %v236 = vadd.f32 %v165, %v218
  %v237 = vadd.f32 %v166, %v218
  %v238 = vadd.f32 %v167, %v218
  %v239 = vadd.f32 %v168, %v218
  %v240 = vadd.f32 %v169, %v218
  %v241 = vadd.f32 %v170, %v218
  %v242 = vadd.f32 %v171, %v218
  %v243 = vadd.f32 %v172, %v218
  %v244 = vadd.f32 %v173, %v218
  %v245 = vadd.f32 %v174, %v218
  %v246 = vadd.f32 %v175, %v218
  %v247 = vadd.f32 %v176, %v218
  %v248 = vadd.f32 %v177, %v218
  %v249 = vadd.f32 %v178, %v218
  %v250 = vadd.f32 %v179, %v218
  %v251 = vadd.f32 %v180, %v218
  %v252 = vadd.f32 %v181, %v218
  %v253 = vadd.f32 %v182, %v218
  %v254 = vadd.f32 %v183, %v218
  %v255 = vadd.f32 %v184, %v218
  %v256 = vadd.f32 %v185, %v218
  %v257 = vadd.f32 %v186, %v218
  %v258 = vadd.f32 %v187, %v218
  %v259 = vadd.f32 %v188, %v218
  %v260 = vadd.f32 %v189, %v218
  %v261 = vadd.f32 %v190, %v218
  %v262 = vadd.f32 %v191, %v218
  %v263 = vadd.f32 %v192, %v218
  %v264 = vadd.f32 %v193, %v218
  %v265 = vadd.f32 %v194, %v218
  %v266 = vadd.f32 %v195, %v218
  %v267 = vadd.f32 %v196, %v218
  %v268 = vadd.f32 %v197, %v218
  %v269 = vadd.f32 %v198, %v218
  %v270 = vadd.f32 %v199, %v218
  %v271 = vadd.f32 %v200, %v218
  %v272 = vadd.f32 %v201, %v218
  %v273 = vadd.f32 %v202, %v218
  %v274 = vadd.f32 %v203, %v218
  %v275 = vadd.f32 %v204, %v218
  %v276 = vadd.f32 %v205, %v218
  %v277 = vadd.f32 %v206, %v218
  %v278 = vadd.f32 %v207, %v218
  %v279 = vadd.f32 %v208, %v218
  %v280 = vadd.f32 %v209, %v218
  %v281 = vadd.f32 %v210, %v218
  %v282 = vadd.f32 %v211, %v218
  %v283 = vadd.f32 %v212, %v218
  %v284 = vxor.u32 %v220, 2147483648
  %v285 = vxor.u32 %v221, 2147483648
  %v286 = vxor.u32 %v222, 2147483648
  %v287 = vxor.u32 %v223, 2147483648
  %v288 = vxor.u32 %v224, 2147483648
  %v289 = vxor.u32 %v225, 2147483648
  %v290 = vxor.u32 %v226, 2147483648
  %v291 = vxor.u32 %v227, 2147483648
  %v292 = vxor.u32 %v228, 2147483648
  %v293 = vxor.u32 %v229, 2147483648
  %v294 = vxor.u32 %v230, 2147483648
  %v295 = vxor.u32 %v231, 2147483648
  %v296 = vxor.u32 %v232, 2147483648
  %v297 = vxor.u32 %v233, 2147483648
  %v298 = vxor.u32 %v234, 2147483648
  %v299 = vxor.u32 %v235, 2147483648
  %v300 = vxor.u32 %v236, 2147483648
  %v301 = vxor.u32 %v237, 2147483648
  %v302 = vxor.u32 %v238, 2147483648
  %v303 = vxor.u32 %v239, 2147483648
  %v304 = vxor.u32 %v240, 2147483648
  %v305 = vxor.u32 %v241, 2147483648
  %v306 = vxor.u32 %v242, 2147483648
  %v307 = vxor.u32 %v243, 2147483648
  %v308 = vxor.u32 %v244, 2147483648
  %v309 = vxor.u32 %v245, 2147483648
  %v310 = vxor.u32 %v246, 2147483648
  %v311 = vxor.u32 %v247, 2147483648
  %v312 = vxor.u32 %v248, 2147483648
  %v313 = vxor.u32 %v249, 2147483648
  %v314 = vxor.u32 %v250, 2147483648
  %v315 = vxor.u32 %v251, 2147483648
  %v316 = vxor.u32 %v252, 2147483648
  %v317 = vxor.u32 %v253, 2147483648
  %v318 = vxor.u32 %v254, 2147483648
  %v319 = vxor.u32 %v255, 2147483648
  %v320 = vxor.u32 %v256, 2147483648
  %v321 = vxor.u32 %v257, 2147483648
  %v322 = vxor.u32 %v258, 2147483648
  %v323 = vxor.u32 %v259, 2147483648
  %v324 = vxor.u32 %v260, 2147483648
  %v325 = vxor.u32 %v261, 2147483648
  %v326 = vxor.u32 %v262, 2147483648
  %v327 = vxor.u32 %v263, 2147483648
  %v328 = vxor.u32 %v264, 2147483648
  %v329 = vxor.u32 %v265, 2147483648
  %v330 = vxor.u32 %v266, 2147483648
  %v331 = vxor.u32 %v267, 2147483648
  %v332 = vxor.u32 %v268, 2147483648
  %v333 = vxor.u32 %v269, 2147483648
  %v334 = vxor.u32 %v270, 2147483648
  %v335 = vxor.u32 %v271, 2147483648
  %v336 = vxor.u32 %v272, 2147483648
  %v337 = vxor.u32 %v273, 2147483648
  %v338 = vxor.u32 %v274, 2147483648
  %v339 = vxor.u32 %v275, 2147483648
  %v340 = vxor.u32 %v276, 2147483648
  %v341 = vxor.u32 %v277, 2147483648
  %v342 = vxor.u32 %v278, 2147483648
  %v343 = vxor.u32 %v279, 2147483648
  %v344 = vxor.u32 %v280, 2147483648
  %v345 = vxor.u32 %v281, 2147483648
  %v346 = vxor.u32 %v282, 2147483648
  %v347 = vxor.u32 %v283, 2147483648
  %v348 = vmul.f32 %v284, 1.442695
  %v349 = vpow.pop %v348
  %v350 = vmul.f32 %v285, 1.442695
  %v351 = vpow.pop %v350
  %v352 = vmul.f32 %v286, 1.442695
  %v353 = vpow.pop %v352
  %v354 = vmul.f32 %v287, 1.442695
  %v355 = vpow.pop %v354
  %v356 = vmul.f32 %v288, 1.442695
  %v357 = vpow.pop %v356
  %v358 = vmul.f32 %v289, 1.442695
  %v359 = vpow.pop %v358
  %v360 = vmul.f32 %v290, 1.442695
  %v361 = vpow.pop %v360
  %v362 = vmul.f32 %v291, 1.442695
  %v363 = vpow.pop %v362
  %v364 = vmul.f32 %v292, 1.442695
  %v365 = vpow.pop %v364
  %v366 = vmul.f32 %v293, 1.442695
  %v367 = vpow.pop %v366
  %v368 = vmul.f32 %v294, 1.442695
  %v369 = vpow.pop %v368
  %v370 = vmul.f32 %v295, 1.442695
  %v371 = vpow.pop %v370
  %v372 = vmul.f32 %v296, 1.442695
  %v373 = vpow.pop %v372
  %v374 = vmul.f32 %v297, 1.442695
  %v375 = vpow.pop %v374
  %v376 = vmul.f32 %v298, 1.442695
  %v377 = vpow.pop %v376
  %v378 = vmul.f32 %v299, 1.442695
  %v379 = vpow.pop %v378
  %v380 = vmul.f32 %v300, 1.442695
  %v381 = vpow.pop %v380
  %v382 = vmul.f32 %v301, 1.442695
  %v383 = vpow.pop %v382
  %v384 = vmul.f32 %v302, 1.442695
  %v385 = vpow.pop %v384
  %v386 = vmul.f32 %v303, 1.442695
  %v387 = vpow.pop %v386
  %v388 = vmul.f32 %v304, 1.442695
  %v389 = vpow.pop %v388
  %v390 = vmul.f32 %v305, 1.442695
  %v391 = vpow.pop %v390
  %v392 = vmul.f32 %v306, 1.442695
  %v393 = vpow.pop %v392
  %v394 = vmul.f32 %v307, 1.442695
  %v395 = vpow.pop %v394
  %v396 = vmul.f32 %v308, 1.442695
  %v397 = vpow.pop %v396
  %v398 = vmul.f32 %v309, 1.442695
  %v399 = vpow.pop %v398
  %v400 = vmul.f32 %v310, 1.442695
  %v401 = vpow.pop %v400
  %v402 = vmul.f32 %v311, 1.442695
  %v403 = vpow.pop %v402
  %v404 = vmul.f32 %v312, 1.442695
  %v405 = vpow.pop %v404
  %v406 = vmul.f32 %v313, 1.442695
  %v407 = vpow.pop %v406
  %v408 = vmul.f32 %v314, 1.442695
  %v409 = vpow.pop %v408
  %v410 = vmul.f32 %v315, 1.442695
  %v411 = vpow.pop %v410
  %v412 = vmul.f32 %v316, 1.442695
  %v413 = vpow.pop %v412
  %v414 = vmul.f32 %v317, 1.442695
  %v415 = vpow.pop %v414
  %v416 = vmul.f32 %v318, 1.442695
  %v417 = vpow.pop %v416
  %v418 = vmul.f32 %v319, 1.442695
  %v419 = vpow.pop %v418
  %v420 = vmul.f32 %v320, 1.442695
  %v421 = vpow.pop %v420
  %v422 = vmul.f32 %v321, 1.442695
  %v423 = vpow.pop %v422
  %v424 = vmul.f32 %v322, 1.442695
  %v425 = vpow.pop %v424
  %v426 = vmul.f32 %v323, 1.442695
  %v427 = vpow.pop %v426
  %v428 = vmul.f32 %v324, 1.442695
  %v429 = vpow.pop %v428
  %v430 = vmul.f32 %v325, 1.442695
  %v431 = vpow.pop %v430
  %v432 = vmul.f32 %v326, 1.442695
  %v433 = vpow.pop %v432
  %v434 = vmul.f32 %v327, 1.442695
  %v435 = vpow.pop %v434
  %v436 = vmul.f32 %v328, 1.442695
  %v437 = vpow.pop %v436
  %v438 = vmul.f32 %v329, 1.442695
  %v439 = vpow.pop %v438
  %v440 = vmul.f32 %v330, 1.442695
  %v441 = vpow.pop %v440
  %v442 = vmul.f32 %v331, 1.442695
  %v443 = vpow.pop %v442
  %v444 = vmul.f32 %v332, 1.442695
  %v445 = vpow.pop %v444
  %v446 = vmul.f32 %v333, 1.442695
  %v447 = vpow.pop %v446
  %v448 = vmul.f32 %v334, 1.442695
  %v449 = vpow.pop %v448
  %v450 = vmul.f32 %v335, 1.442695
  %v451 = vpow.pop %v450
  %v452 = vmul.f32 %v336, 1.442695
  %v453 = vpow.pop %v452
  %v454 = vmul.f32 %v337, 1.442695
  %v455 = vpow.pop %v454
  %v456 = vmul.f32 %v338, 1.442695
  %v457 = vpow.pop %v456
  %v458 = vmul.f32 %v339, 1.442695
  %v459 = vpow.pop %v458
  %v460 = vmul.f32 %v340, 1.442695
  %v461 = vpow.pop %v460
  %v462 = vmul.f32 %v341, 1.442695
  %v463 = vpow.pop %v462
  %v464 = vmul.f32 %v342, 1.442695
  %v465 = vpow.pop %v464
  %v466 = vmul.f32 %v343, 1.442695
  %v467 = vpow.pop %v466
  %v468 = vmul.f32 %v344, 1.442695
  %v469 = vpow.pop %v468
  %v470 = vmul.f32 %v345, 1.442695
  %v471 = vpow.pop %v470
  %v472 = vmul.f32 %v346, 1.442695
  %v473 = vpow.pop %v472
  %v474 = vmul.f32 %v347, 1.442695
  %v475 = vpow.pop %v474
  %v476 = vadd.f32 %v349, 1.0
  %v477 = vadd.f32 %v351, 1.0
  %v478 = vadd.f32 %v353, 1.0
  %v479 = vadd.f32 %v355, 1.0
  %v480 = vadd.f32 %v357, 1.0
  %v481 = vadd.f32 %v359, 1.0
  %v482 = vadd.f32 %v361, 1.0
  %v483 = vadd.f32 %v363, 1.0
  %v484 = vadd.f32 %v365, 1.0
  %v485 = vadd.f32 %v367, 1.0
  %v486 = vadd.f32 %v369, 1.0
  %v487 = vadd.f32 %v371, 1.0
  %v488 = vadd.f32 %v373, 1.0
  %v489 = vadd.f32 %v375, 1.0
  %v490 = vadd.f32 %v377, 1.0
  %v491 = vadd.f32 %v379, 1.0
  %v492 = vadd.f32 %v381, 1.0
  %v493 = vadd.f32 %v383, 1.0
  %v494 = vadd.f32 %v385, 1.0
  %v495 = vadd.f32 %v387, 1.0
  %v496 = vadd.f32 %v389, 1.0
  %v497 = vadd.f32 %v391, 1.0
  %v498 = vadd.f32 %v393, 1.0
  %v499 = vadd.f32 %v395, 1.0
  %v500 = vadd.f32 %v397, 1.0
  %v501 = vadd.f32 %v399, 1.0
  %v502 = vadd.f32 %v401, 1.0
  %v503 = vadd.f32 %v403, 1.0
  %v504 = vadd.f32 %v405, 1.0
  %v505 = vadd.f32 %v407, 1.0
  %v506 = vadd.f32 %v409, 1.0
  %v507 = vadd.f32 %v411, 1.0
  %v508 = vadd.f32 %v413, 1.0
  %v509 = vadd.f32 %v415, 1.0
  %v510 = vadd.f32 %v417, 1.0
  %v511 = vadd.f32 %v419, 1.0
  %v512 = vadd.f32 %v421, 1.0
  %v513 = vadd.f32 %v423, 1.0
  %v514 = vadd.f32 %v425, 1.0
  %v515 = vadd.f32 %v427, 1.0
  %v516 = vadd.f32 %v429, 1.0
  %v517 = vadd.f32 %v431, 1.0
  %v518 = vadd.f32 %v433, 1.0
  %v519 = vadd.f32 %v435, 1.0
  %v520 = vadd.f32 %v437, 1.0
  %v521 = vadd.f32 %v439, 1.0
  %v522 = vadd.f32 %v441, 1.0
  %v523 = vadd.f32 %v443, 1.0
  %v524 = vadd.f32 %v445, 1.0
  %v525 = vadd.f32 %v447, 1.0
  %v526 = vadd.f32 %v449, 1.0
  %v527 = vadd.f32 %v451, 1.0
  %v528 = vadd.f32 %v453, 1.0
  %v529 = vadd.f32 %v455, 1.0
  %v530 = vadd.f32 %v457, 1.0
  %v531 = vadd.f32 %v459, 1.0
  %v532 = vadd.f32 %v461, 1.0
  %v533 = vadd.f32 %v463, 1.0
  %v534 = vadd.f32 %v465, 1.0
  %v535 = vadd.f32 %v467, 1.0
  %v536 = vadd.f32 %v469, 1.0
  %v537 = vadd.f32 %v471, 1.0
  %v538 = vadd.f32 %v473, 1.0
  %v539 = vadd.f32 %v475, 1.0
  %v540 = vrcp.pop %v476
  %v541 = vmul.f32 1.0, %v540
  %v542 = vrcp.pop %v477
  %v543 = vmul.f32 1.0, %v542
  %v544 = vrcp.pop %v478
  %v545 = vmul.f32 1.0, %v544
  %v546 = vrcp.pop %v479
  %v547 = vmul.f32 1.0, %v546
  %v548 = vrcp.pop %v480
  %v549 = vmul.f32 1.0, %v548
  %v550 = vrcp.pop %v481
  %v551 = vmul.f32 1.0, %v550
  %v552 = vrcp.pop %v482
  %v553 = vmul.f32 1.0, %v552
  %v554 = vrcp.pop %v483
  %v555 = vmul.f32 1.0, %v554
  %v556 = vrcp.pop %v484
  %v557 = vmul.f32 1.0, %v556
  %v558 = vrcp.pop %v485
  %v559 = vmul.f32 1.0, %v558
  %v560 = vrcp.pop %v486
  %v561 = vmul.f32 1.0, %v560
  %v562 = vrcp.pop %v487
  %v563 = vmul.f32 1.0, %v562
  %v564 = vrcp.pop %v488
  %v565 = vmul.f32 1.0, %v564
  %v566 = vrcp.pop %v489
  %v567 = vmul.f32 1.0, %v566
  %v568 = vrcp.pop %v490
  %v569 = vmul.f32 1.0, %v568
  %v570 = vrcp.pop %v491
  %v571 = vmul.f32 1.0, %v570
  %v572 = vrcp.pop %v492
  %v573 = vmul.f32 1.0, %v572
  %v574 = vrcp.pop %v493
  %v575 = vmul.f32 1.0, %v574
  %v576 = vrcp.pop %v494
  %v577 = vmul.f32 1.0, %v576
  %v578 = vrcp.pop %v495
  %v579 = vmul.f32 1.0, %v578
  %v580 = vrcp.pop %v496
  %v581 = vmul.f32 1.0, %v580
  %v582 = vrcp.pop %v497
  %v583 = vmul.f32 1.0, %v582
  %v584 = vrcp.pop %v498
  %v585 = vmul.f32 1.0, %v584
  %v586 = vrcp.pop %v499
  %v587 = vmul.f32 1.0, %v586
  %v588 = vrcp.pop %v500
  %v589 = vmul.f32 1.0, %v588
  %v590 = vrcp.pop %v501
  %v591 = vmul.f32 1.0, %v590
  %v592 = vrcp.pop %v502
  %v593 = vmul.f32 1.0, %v592
  %v594 = vrcp.pop %v503
  %v595 = vmul.f32 1.0, %v594
  %v596 = vrcp.pop %v504
  %v597 = vmul.f32 1.0, %v596
  %v598 = vrcp.pop %v505
  %v599 = vmul.f32 1.0, %v598
  %v600 = vrcp.pop %v506
  %v601 = vmul.f32 1.0, %v600
  %v602 = vrcp.pop %v507
  %v603 = vmul.f32 1.0, %v602
  %v604 = vrcp.pop %v508
  %v605 = vmul.f32 1.0, %v604
  %v606 = vrcp.pop %v509
  %v607 = vmul.f32 1.0, %v606
  %v608 = vrcp.pop %v510
  %v609 = vmul.f32 1.0, %v608
  %v610 = vrcp.pop %v511
  %v611 = vmul.f32 1.0, %v610
  %v612 = vrcp.pop %v512
  %v613 = vmul.f32 1.0, %v612
  %v614 = vrcp.pop %v513
  %v615 = vmul.f32 1.0, %v614
  %v616 = vrcp.pop %v514
  %v617 = vmul.f32 1.0, %v616
  %v618 = vrcp.pop %v515
  %v619 = vmul.f32 1.0, %v618
  %v620 = vrcp.pop %v516
  %v621 = vmul.f32 1.0, %v620
  %v622 = vrcp.pop %v517
  %v623 = vmul.f32 1.0, %v622
  %v624 = vrcp.pop %v518
  %v625 = vmul.f32 1.0, %v624
  %v626 = vrcp.pop %v519
  %v627 = vmul.f32 1.0, %v626
  %v628 = vrcp.pop %v520
  %v629 = vmul.f32 1.0, %v628
  %v630 = vrcp.pop %v521
  %v631 = vmul.f32 1.0, %v630
  %v632 = vrcp.pop %v522
  %v633 = vmul.f32 1.0, %v632
  %v634 = vrcp.pop %v523
  %v635 = vmul.f32 1.0, %v634
  %v636 = vrcp.pop %v524
  %v637 = vmul.f32 1.0, %v636
  %v638 = vrcp.pop %v525
  %v639 = vmul.f32 1.0, %v638
  %v640 = vrcp.pop %v526
  %v641 = vmul.f32 1.0, %v640
  %v642 = vrcp.pop %v527
  %v643 = vmul.f32 1.0, %v642
  %v644 = vrcp.pop %v528
  %v645 = vmul.f32 1.0, %v644
  %v646 = vrcp.pop %v529
  %v647 = vmul.f32 1.0, %v646
  %v648 = vrcp.pop %v530
  %v649 = vmul.f32 1.0, %v648
  %v650 = vrcp.pop %v531
  %v651 = vmul.f32 1.0, %v650
  %v652 = vrcp.pop %v532
  %v653 = vmul.f32 1.0, %v652
  %v654 = vrcp.pop %v533
  %v655 = vmul.f32 1.0, %v654
  %v656 = vrcp.pop %v534
  %v657 = vmul.f32 1.0, %v656
  %v658 = vrcp.pop %v535
  %v659 = vmul.f32 1.0, %v658
  %v660 = vrcp.pop %v536
  %v661 = vmul.f32 1.0, %v660
  %v662 = vrcp.pop %v537
  %v663 = vmul.f32 1.0, %v662
  %v664 = vrcp.pop %v538
  %v665 = vmul.f32 1.0, %v664
  %v666 = vrcp.pop %v539
  %v667 = vmul.f32 1.0, %v666
  %v668 = vmul.f32 %v220, %v541
  %v669 = vmul.f32 %v221, %v543
  %v670 = vmul.f32 %v222, %v545
  %v671 = vmul.f32 %v223, %v547
  %v672 = vmul.f32 %v224, %v549
  %v673 = vmul.f32 %v225, %v551
  %v674 = vmul.f32 %v226, %v553
  %v675 = vmul.f32 %v227, %v555
  %v676 = vmul.f32 %v228, %v557
  %v677 = vmul.f32 %v229, %v559
  %v678 = vmul.f32 %v230, %v561
  %v679 = vmul.f32 %v231, %v563
  %v680 = vmul.f32 %v232, %v565
  %v681 = vmul.f32 %v233, %v567
  %v682 = vmul.f32 %v234, %v569
  %v683 = vmul.f32 %v235, %v571
  %v684 = vmul.f32 %v236, %v573
  %v685 = vmul.f32 %v237, %v575
  %v686 = vmul.f32 %v238, %v577
  %v687 = vmul.f32 %v239, %v579
  %v688 = vmul.f32 %v240, %v581
  %v689 = vmul.f32 %v241, %v583
  %v690 = vmul.f32 %v242, %v585
  %v691 = vmul.f32 %v243, %v587
  %v692 = vmul.f32 %v244, %v589
  %v693 = vmul.f32 %v245, %v591
  %v694 = vmul.f32 %v246, %v593
  %v695 = vmul.f32 %v247, %v595
  %v696 = vmul.f32 %v248, %v597
  %v697 = vmul.f32 %v249, %v599
  %v698 = vmul.f32 %v250, %v601
  %v699 = vmul.f32 %v251, %v603
  %v700 = vmul.f32 %v252, %v605
  %v701 = vmul.f32 %v253, %v607
  %v702 = vmul.f32 %v254, %v609
  %v703 = vmul.f32 %v255, %v611
  %v704 = vmul.f32 %v256, %v613
  %v705 = vmul.f32 %v257, %v615
  %v706 = vmul.f32 %v258, %v617
  %v707 = vmul.f32 %v259, %v619
  %v708 = vmul.f32 %v260, %v621
  %v709 = vmul.f32 %v261, %v623
  %v710 = vmul.f32 %v262, %v625
  %v711 = vmul.f32 %v263, %v627
  %v712 = vmul.f32 %v264, %v629
  %v713 = vmul.f32 %v265, %v631
  %v714 = vmul.f32 %v266, %v633
  %v715 = vmul.f32 %v267, %v635
  %v716 = vmul.f32 %v268, %v637
  %v717 = vmul.f32 %v269, %v639
  %v718 = vmul.f32 %v270, %v641
  %v719 = vmul.f32 %v271, %v643
  %v720 = vmul.f32 %v272, %v645
  %v721 = vmul.f32 %v273, %v647
  %v722 = vmul.f32 %v274, %v649
  %v723 = vmul.f32 %v275, %v651
  %v724 = vmul.f32 %v276, %v653
  %v725 = vmul.f32 %v277, %v655
  %v726 = vmul.f32 %v278, %v657
  %v727 = vmul.f32 %v279, %v659
  %v728 = vmul.f32 %v280, %v661
  %v729 = vmul.f32 %v281, %v663
  %v730 = vmul.f32 %v282, %v665
  %v731 = vmul.f32 %v283, %v667
  %732 = vst [vmem:[%s3] sm:$0xff] %v668
  %733 = vst [vmem:[%s3 + $0x8] sm:$0xff] %v669
  %734 = vst [vmem:[%s3 + $0x10] sm:$0xff] %v670
  %735 = vst [vmem:[%s3 + $0x18] sm:$0xff] %v671
  %736 = vst [vmem:[%s3 + $0x20] sm:$0xff] %v672
  %737 = vst [vmem:[%s3 + $0x28] sm:$0xff] %v673
  %738 = vst [vmem:[%s3 + $0x30] sm:$0xff] %v674
  %739 = vst [vmem:[%s3 + $0x38] sm:$0xff] %v675
  %740 = vst [vmem:[%s3 + $0x40] sm:$0xff] %v676
  %741 = vst [vmem:[%s3 + $0x48] sm:$0xff] %v677
  %742 = vst [vmem:[%s3 + $0x50] sm:$0xff] %v678
  %743 = vst [vmem:[%s3 + $0x58] sm:$0xff] %v679
  %744 = vst [vmem:[%s3 + $0x60] sm:$0xff] %v680
  %745 = vst [vmem:[%s3 + $0x68] sm:$0xff] %v681
  %746 = vst [vmem:[%s3 + $0x70] sm:$0xff] %v682
  %747 = vst [vmem:[%s3 + $0x78] sm:$0xff] %v683
  %748 = vst [vmem:[%s3 + $0x80] sm:$0xff] %v684
  %749 = vst [vmem:[%s3 + $0x88] sm:$0xff] %v685
  %750 = vst [vmem:[%s3 + $0x90] sm:$0xff] %v686
  %751 = vst [vmem:[%s3 + $0x98] sm:$0xff] %v687
  %752 = vst [vmem:[%s3 + $0xa0] sm:$0xff] %v688
  %753 = vst [vmem:[%s3 + $0xa8] sm:$0xff] %v689
  %754 = vst [vmem:[%s3 + $0xb0] sm:$0xff] %v690
  %755 = vst [vmem:[%s3 + $0xb8] sm:$0xff] %v691
  %756 = vst [vmem:[%s3 + $0xc0] sm:$0xff] %v692
  %757 = vst [vmem:[%s3 + $0xc8] sm:$0xff] %v693
  %758 = vst [vmem:[%s3 + $0xd0] sm:$0xff] %v694
  %759 = vst [vmem:[%s3 + $0xd8] sm:$0xff] %v695
  %760 = vst [vmem:[%s3 + $0xe0] sm:$0xff] %v696
  %761 = vst [vmem:[%s3 + $0xe8] sm:$0xff] %v697
  %762 = vst [vmem:[%s3 + $0xf0] sm:$0xff] %v698
  %763 = vst [vmem:[%s3 + $0xf8] sm:$0xff] %v699
  %764 = vst [vmem:[%s3 + $0x100] sm:$0xff] %v700
  %765 = vst [vmem:[%s3 + $0x108] sm:$0xff] %v701
  %766 = vst [vmem:[%s3 + $0x110] sm:$0xff] %v702
  %767 = vst [vmem:[%s3 + $0x118] sm:$0xff] %v703
  %768 = vst [vmem:[%s3 + $0x120] sm:$0xff] %v704
  %769 = vst [vmem:[%s3 + $0x128] sm:$0xff] %v705
  %770 = vst [vmem:[%s3 + $0x130] sm:$0xff] %v706
  %771 = vst [vmem:[%s3 + $0x138] sm:$0xff] %v707
  %772 = vst [vmem:[%s3 + $0x140] sm:$0xff] %v708
  %773 = vst [vmem:[%s3 + $0x148] sm:$0xff] %v709
  %774 = vst [vmem:[%s3 + $0x150] sm:$0xff] %v710
  %775 = vst [vmem:[%s3 + $0x158] sm:$0xff] %v711
  %776 = vst [vmem:[%s3 + $0x160] sm:$0xff] %v712
  %777 = vst [vmem:[%s3 + $0x168] sm:$0xff] %v713
  %778 = vst [vmem:[%s3 + $0x170] sm:$0xff] %v714
  %779 = vst [vmem:[%s3 + $0x178] sm:$0xff] %v715
  %780 = vst [vmem:[%s3 + $0x180] sm:$0xff] %v716
  %781 = vst [vmem:[%s3 + $0x188] sm:$0xff] %v717
  %782 = vst [vmem:[%s3 + $0x190] sm:$0xff] %v718
  %783 = vst [vmem:[%s3 + $0x198] sm:$0xff] %v719
  %784 = vst [vmem:[%s3 + $0x1a0] sm:$0xff] %v720
  %785 = vst [vmem:[%s3 + $0x1a8] sm:$0xff] %v721
  %786 = vst [vmem:[%s3 + $0x1b0] sm:$0xff] %v722
  %787 = vst [vmem:[%s3 + $0x1b8] sm:$0xff] %v723
  %788 = vst [vmem:[%s3 + $0x1c0] sm:$0xff] %v724
  %789 = vst [vmem:[%s3 + $0x1c8] sm:$0xff] %v725
  %790 = vst [vmem:[%s3 + $0x1d0] sm:$0xff] %v726
  %791 = vst [vmem:[%s3 + $0x1d8] sm:$0xff] %v727
  %792 = vst [vmem:[%s3 + $0x1e0] sm:$0xff] %v728
  %793 = vst [vmem:[%s3 + $0x1e8] sm:$0xff] %v729
  %794 = vst [vmem:[%s3 + $0x1f0] sm:$0xff] %v730
  %795 = vst [vmem:[%s3 + $0x1f8] sm:$0xff] %v731
  // Predicated region
  $region14: #{conv_bn_silu.3} parent=0 // pred_check
    _
  $region15: #{conv_bn_silu.3} parent=0 // pred_check_branch
    %797 = sbr.rel (0) target = $region17
  $region16: #{conv_bn_silu.3} parent=0 // pred_region
    _
  $region17: #{conv_bn_silu.3} parent=0 // pred_fallthru
    _
  // Predicated region
  $region18: #{conv_bn_silu.3} parent=0 // pred_check
    _
  $region19: #{conv_bn_silu.3} parent=0 // pred_check_branch
    %799 = sbr.rel (0) target = $region21
  $region20: #{conv_bn_silu.3} parent=0 // pred_region
    _
  $region21: #{conv_bn_silu.3} parent=0 // pred_fallthru
    _

// kernel: conv_bn_silu.2
$region0: #{conv_bn_silu.2}
  #allocation0 [shape = 'u32[]', space=smem, size = 0x4, offset = 0x4, fixed_abs, tag = 'smem constant byte address 0x4 - core index']
  #allocation1 [shape = 'u32[144,128]{1,0:T(1,128)}', space=vmem, size = 0x12000, scoped, tag = 'internal scratch']
  %s0 = inlined_call_operand.vmem [shape: bf16[512,128], index: 0, kind: input, shape index: {}]
  %s1 = inlined_call_operand.vmem [shape: bf16[128,128], index: 1, kind: input, shape index: {}]
  %s2 = inlined_call_operand.vmem [shape: bf16[512,128], index: 2, kind: output, shape index: {0}]
  %s3 = inlined_call_operand.vmem [shape: f32[1,2,128], index: 3, kind: output, shape index: {1}]
  %4 = xla_tuple %s2, %s3
  %s5 = sld [smem:[#allocation0]]
  $region26: #{conv_bn_silu.2} parent=0
    _
  %s7 = ssub.s32 1, %s5
  %s8 = scalar_select 0, %s7, %s5
  // Predicated region
  $region2: #{conv_bn_silu.2} parent=0 // pred_check
    _
  $region3: #{conv_bn_silu.2} parent=0 // pred_check_branch
    %10 = sbr.rel (0) target = $region5
  $region4: #{conv_bn_silu.2} parent=0 // pred_region
    _
  $region5: #{conv_bn_silu.2} parent=0 // pred_fallthru
    _
  // Predicated region
  $region6: #{conv_bn_silu.2} parent=0 // pred_check
    _
  $region7: #{conv_bn_silu.2} parent=0 // pred_check_branch
    %12 = sbr.rel (0) target = $region9
  $region8: #{conv_bn_silu.2} parent=0 // pred_region
    _
  $region9: #{conv_bn_silu.2} parent=0 // pred_fallthru
    _
  %v14 = vld [vmem:[%s0] sm:$0xf]
  %v15 = vld [vmem:[%s0 + $0x4] sm:$0xf]
  %v16 = vld [vmem:[%s0 + $0x8] sm:$0xf]
  %v17 = vld [vmem:[%s0 + $0xc] sm:$0xf]
  %v18 = vld [vmem:[%s0 + $0x10] sm:$0xf]
  %v19 = vld [vmem:[%s0 + $0x14] sm:$0xf]
  %v20 = vld [vmem:[%s0 + $0x18] sm:$0xf]
  %v21 = vld [vmem:[%s0 + $0x1c] sm:$0xf]
  %v22 = vld [vmem:[%s0 + $0x20] sm:$0xf]
  %v23 = vld [vmem:[%s0 + $0x24] sm:$0xf]
  %v24 = vld [vmem:[%s0 + $0x28] sm:$0xf]
  %v25 = vld [vmem:[%s0 + $0x2c] sm:$0xf]
  %v26 = vld [vmem:[%s0 + $0x30] sm:$0xf]
  %v27 = vld [vmem:[%s0 + $0x34] sm:$0xf]
  %v28 = vld [vmem:[%s0 + $0x38] sm:$0xf]
  %v29 = vld [vmem:[%s0 + $0x3c] sm:$0xf]
  %v30 = vld [vmem:[%s0 + $0x40] sm:$0xf]
  %v31 = vld [vmem:[%s0 + $0x44] sm:$0xf]
  %v32 = vld [vmem:[%s0 + $0x48] sm:$0xf]
  %v33 = vld [vmem:[%s0 + $0x4c] sm:$0xf]
  %v34 = vld [vmem:[%s0 + $0x50] sm:$0xf]
  %v35 = vld [vmem:[%s0 + $0x54] sm:$0xf]
  %v36 = vld [vmem:[%s0 + $0x58] sm:$0xf]
  %v37 = vld [vmem:[%s0 + $0x5c] sm:$0xf]
  %v38 = vld [vmem:[%s0 + $0x60] sm:$0xf]
  %v39 = vld [vmem:[%s0 + $0x64] sm:$0xf]
  %v40 = vld [vmem:[%s0 + $0x68] sm:$0xf]
  %v41 = vld [vmem:[%s0 + $0x6c] sm:$0xf]
  %v42 = vld [vmem:[%s0 + $0x70] sm:$0xf]
  %v43 = vld [vmem:[%s0 + $0x74] sm:$0xf]
  %v44 = vld [vmem:[%s0 + $0x78] sm:$0xf]
  %v45 = vld [vmem:[%s0 + $0x7c] sm:$0xf]
  %v46 = vld [vmem:[%s0 + $0x80] sm:$0xf]
  %v47 = vld [vmem:[%s0 + $0x84] sm:$0xf]
  %v48 = vld [vmem:[%s0 + $0x88] sm:$0xf]
  %v49 = vld [vmem:[%s0 + $0x8c] sm:$0xf]
  %v50 = vld [vmem:[%s0 + $0x90] sm:$0xf]
  %v51 = vld [vmem:[%s0 + $0x94] sm:$0xf]
  %v52 = vld [vmem:[%s0 + $0x98] sm:$0xf]
  %v53 = vld [vmem:[%s0 + $0x9c] sm:$0xf]
  %v54 = vld [vmem:[%s0 + $0xa0] sm:$0xf]
  %v55 = vld [vmem:[%s0 + $0xa4] sm:$0xf]
  %v56 = vld [vmem:[%s0 + $0xa8] sm:$0xf]
  %v57 = vld [vmem:[%s0 + $0xac] sm:$0xf]
  %v58 = vld [vmem:[%s0 + $0xb0] sm:$0xf]
  %v59 = vld [vmem:[%s0 + $0xb4] sm:$0xf]
  %v60 = vld [vmem:[%s0 + $0xb8] sm:$0xf]
  %v61 = vld [vmem:[%s0 + $0xbc] sm:$0xf]
  %v62 = vld [vmem:[%s0 + $0xc0] sm:$0xf]
  %v63 = vld [vmem:[%s0 + $0xc4] sm:$0xf]
  %v64 = vld [vmem:[%s0 + $0xc8] sm:$0xf]
  %v65 = vld [vmem:[%s0 + $0xcc] sm:$0xf]
  %v66 = vld [vmem:[%s0 + $0xd0] sm:$0xf]
  %v67 = vld [vmem:[%s0 + $0xd4] sm:$0xf]
  %v68 = vld [vmem:[%s0 + $0xd8] sm:$0xf]
  %v69 = vld [vmem:[%s0 + $0xdc] sm:$0xf]
  %v70 = vld [vmem:[%s0 + $0xe0] sm:$0xf]
  %v71 = vld [vmem:[%s0 + $0xe4] sm:$0xf]
  %v72 = vld [vmem:[%s0 + $0xe8] sm:$0xf]
  %v73 = vld [vmem:[%s0 + $0xec] sm:$0xf]
  %v74 = vld [vmem:[%s0 + $0xf0] sm:$0xf]
  %v75 = vld [vmem:[%s0 + $0xf4] sm:$0xf]
  %v76 = vld [vmem:[%s0 + $0xf8] sm:$0xf]
  %v77 = vld [vmem:[%s0 + $0xfc] sm:$0xf]
  %v78 = vld [vmem:[%s1] sm:$0xf]
  %v79 = vld [vmem:[%s1 + $0x4] sm:$0xf]
  %v80 = vld [vmem:[%s1 + $0x8] sm:$0xf]
  %v81 = vld [vmem:[%s1 + $0xc] sm:$0xf]
  %v82 = vld [vmem:[%s1 + $0x10] sm:$0xf]
  %v83 = vld [vmem:[%s1 + $0x14] sm:$0xf]
  %v84 = vld [vmem:[%s1 + $0x18] sm:$0xf]
  %v85 = vld [vmem:[%s1 + $0x1c] sm:$0xf]
  %v86 = vld [vmem:[%s1 + $0x20] sm:$0xf]
  %v87 = vld [vmem:[%s1 + $0x24] sm:$0xf]
  %v88 = vld [vmem:[%s1 + $0x28] sm:$0xf]
  %v89 = vld [vmem:[%s1 + $0x2c] sm:$0xf]
  %v90 = vld [vmem:[%s1 + $0x30] sm:$0xf]
  %v91 = vld [vmem:[%s1 + $0x34] sm:$0xf]
  %v92 = vld [vmem:[%s1 + $0x38] sm:$0xf]
  %v93 = vld [vmem:[%s1 + $0x3c] sm:$0xf]
  %v158 = vunpack.c.l.b16 %v14
  %v159 = vunpack.c.l.b16 %v15
  %v160 = vunpack.c.l.b16 %v16
  %v161 = vunpack.c.l.b16 %v17
  %v162 = vunpack.c.l.b16 %v18
  %v163 = vunpack.c.l.b16 %v19
  %v164 = vunpack.c.l.b16 %v20
  %v165 = vunpack.c.l.b16 %v21
  %v166 = vunpack.c.l.b16 %v22
  %v167 = vunpack.c.l.b16 %v23
  %v168 = vunpack.c.l.b16 %v24
  %v169 = vunpack.c.l.b16 %v25
  %v170 = vunpack.c.l.b16 %v26
  %v171 = vunpack.c.l.b16 %v27
  %v172 = vunpack.c.l.b16 %v28
  %v173 = vunpack.c.l.b16 %v29
  %v174 = vunpack.c.l.b16 %v30
  %v175 = vunpack.c.l.b16 %v31
  %v176 = vunpack.c.l.b16 %v32
  %v177 = vunpack.c.l.b16 %v33
  %v178 = vunpack.c.l.b16 %v34
  %v179 = vunpack.c.l.b16 %v35
  %v180 = vunpack.c.l.b16 %v36
  %v181 = vunpack.c.l.b16 %v37
  %v182 = vunpack.c.l.b16 %v38
  %v183 = vunpack.c.l.b16 %v39
  %v184 = vunpack.c.l.b16 %v40
  %v185 = vunpack.c.l.b16 %v41
  %v186 = vunpack.c.l.b16 %v42
  %v187 = vunpack.c.l.b16 %v43
  %v188 = vunpack.c.l.b16 %v44
  %v189 = vunpack.c.l.b16 %v45
  %v190 = vunpack.c.l.b16 %v46
  %v191 = vunpack.c.l.b16 %v47
  %v192 = vunpack.c.l.b16 %v48
  %v193 = vunpack.c.l.b16 %v49
  %v194 = vunpack.c.l.b16 %v50
  %v195 = vunpack.c.l.b16 %v51
  %v196 = vunpack.c.l.b16 %v52
  %v197 = vunpack.c.l.b16 %v53
  %v198 = vunpack.c.l.b16 %v54
  %v199 = vunpack.c.l.b16 %v55
  %v200 = vunpack.c.l.b16 %v56
  %v201 = vunpack.c.l.b16 %v57
  %v202 = vunpack.c.l.b16 %v58
  %v203 = vunpack.c.l.b16 %v59
  %v204 = vunpack.c.l.b16 %v60
  %v205 = vunpack.c.l.b16 %v61
  %v206 = vunpack.c.l.b16 %v62
  %v207 = vunpack.c.l.b16 %v63
  %v208 = vunpack.c.l.b16 %v64
  %v209 = vunpack.c.l.b16 %v65
  %v210 = vunpack.c.l.b16 %v66
  %v211 = vunpack.c.l.b16 %v67
  %v212 = vunpack.c.l.b16 %v68
  %v213 = vunpack.c.l.b16 %v69
  %v214 = vunpack.c.l.b16 %v70
  %v215 = vunpack.c.l.b16 %v71
  %v216 = vunpack.c.l.b16 %v72
  %v217 = vunpack.c.l.b16 %v73
  %v218 = vunpack.c.l.b16 %v74
  %v219 = vunpack.c.l.b16 %v75
  %v220 = vunpack.c.l.b16 %v76
  %v221 = vunpack.c.l.b16 %v77
  %v222 = vpack.c.b16 %v159, %v158
  %v223 = vpack.c.b16 %v161, %v160
  %v224 = vpack.c.b16 %v163, %v162
  %v225 = vpack.c.b16 %v165, %v164
  %v226 = vpack.c.b16 %v167, %v166
  %v227 = vpack.c.b16 %v169, %v168
  %v228 = vpack.c.b16 %v171, %v170
  %v229 = vpack.c.b16 %v173, %v172
  %v230 = vpack.c.b16 %v175, %v174
  %v231 = vpack.c.b16 %v177, %v176
  %v232 = vpack.c.b16 %v179, %v178
  %v233 = vpack.c.b16 %v181, %v180
  %v234 = vpack.c.b16 %v183, %v182
  %v235 = vpack.c.b16 %v185, %v184
  %v236 = vpack.c.b16 %v187, %v186
  %v237 = vpack.c.b16 %v189, %v188
  %v238 = vpack.c.b16 %v191, %v190
  %v239 = vpack.c.b16 %v193, %v192
  %v240 = vpack.c.b16 %v195, %v194
  %v241 = vpack.c.b16 %v197, %v196
  %v242 = vpack.c.b16 %v199, %v198
  %v243 = vpack.c.b16 %v201, %v200
  %v244 = vpack.c.b16 %v203, %v202
  %v245 = vpack.c.b16 %v205, %v204
  %v246 = vpack.c.b16 %v207, %v206
  %v247 = vpack.c.b16 %v209, %v208
  %v248 = vpack.c.b16 %v211, %v210
  %v249 = vpack.c.b16 %v213, %v212
  %v250 = vpack.c.b16 %v215, %v214
  %v251 = vpack.c.b16 %v217, %v216
  %v252 = vpack.c.b16 %v219, %v218
  %v253 = vpack.c.b16 %v221, %v220
  %v302 = vunpack.c.l.b16 %v78
  %v303 = vunpack.c.l.b16 %v79
  %v304 = vunpack.c.l.b16 %v80
  %v305 = vunpack.c.l.b16 %v81
  %v306 = vunpack.c.l.b16 %v82
  %v307 = vunpack.c.l.b16 %v83
  %v308 = vunpack.c.l.b16 %v84
  %v309 = vunpack.c.l.b16 %v85
  %v310 = vunpack.c.l.b16 %v86
  %v311 = vunpack.c.l.b16 %v87
  %v312 = vunpack.c.l.b16 %v88
  %v313 = vunpack.c.l.b16 %v89
  %v314 = vunpack.c.l.b16 %v90
  %v315 = vunpack.c.l.b16 %v91
  %v316 = vunpack.c.l.b16 %v92
  %v317 = vunpack.c.l.b16 %v93
  %v318 = vpack.c.b16 %v303, %v302
  %v319 = vpack.c.b16 %v305, %v304
  %v320 = vpack.c.b16 %v307, %v306
  %v321 = vpack.c.b16 %v309, %v308
  %v322 = vpack.c.b16 %v311, %v310
  %v323 = vpack.c.b16 %v313, %v312
  %v324 = vpack.c.b16 %v315, %v314
  %v325 = vpack.c.b16 %v317, %v316
  %334 = vmatprep.subr.bf16.mxu0 0
  %335 = vmatpush1.bf16.msra.mxu0 %v325
  %336 = vmatprep.subr.bf16.mxu0 0
  %337 = vmatpush1.bf16.msra.mxu0 %v324
  %338 = vmatprep.subr.bf16.mxu0 0
  %339 = vmatpush1.bf16.msra.mxu0 %v323
  %340 = vmatprep.subr.bf16.mxu0 0
  %341 = vmatpush1.bf16.msra.mxu0 %v322
  %342 = vmatprep.subr.bf16.mxu0 0
  %343 = vmatpush1.bf16.msra.mxu0 %v321
  %344 = vmatprep.subr.bf16.mxu0 0
  %345 = vmatpush1.bf16.msra.mxu0 %v320
  %346 = vmatprep.subr.bf16.mxu0 0
  %347 = vmatpush1.bf16.msra.mxu0 %v319
  %348 = vmatprep.subr.bf16.mxu0 0
  %349 = vmatpush1.bf16.msra.mxu0 %v318
  %350 = vmatprep.subr.bf16.mxu0 0
  %351 = vmatpush2.bf16.msra.mxu0 0
  %352 = vmatprep.subr.bf16.mxu0 0
  %353 = vmatpush2.bf16.msra.mxu0 0
  %354 = vmatprep.subr.bf16.mxu0 0
  %355 = vmatpush2.bf16.msra.mxu0 0
  %356 = vmatprep.subr.bf16.mxu0 0
  %357 = vmatpush2.bf16.msra.mxu0 0
  %358 = vmatprep.subr.bf16.mxu0 0
  %359 = vmatpush2.bf16.msra.mxu0 0
  %360 = vmatprep.subr.bf16.mxu0 0
  %361 = vmatpush2.bf16.msra.mxu0 0
  %362 = vmatprep.subr.bf16.mxu0 0
  %363 = vmatpush2.bf16.msra.mxu0 0
  %364 = vmatprep.subr.bf16.mxu0 0
  %365 = vmatpush2.bf16.msra.mxu0 0
  %366 = vmatprep.mubr.bf16.mxu0 0
  %367 = vmatmul.mubr.bf16.gmra.mxu0 %v222
  %v368 = vpop.f32.mrf.mxu0
  %v369 = vadd.f32 0.0, %v368
  %v370 = vpop.f32.mrf.mxu0
  %v371 = vpop.f32.mrf.mxu0
  %v372 = vadd.f32 0.0, %v371
  %v373 = vpop.f32.mrf.mxu0
  %374 = vmatprep.mubr.bf16.mxu0 0
  %375 = vmatmul.mubr.bf16.gmra.mxu0 %v223
  %v376 = vpop.f32.mrf.mxu0
  %v377 = vadd.f32 0.0, %v376
  %v378 = vpop.f32.mrf.mxu0
  %v379 = vpop.f32.mrf.mxu0
  %v380 = vadd.f32 0.0, %v379
  %v381 = vpop.f32.mrf.mxu0
  %382 = vmatprep.mubr.bf16.mxu0 0
  %383 = vmatmul.mubr.bf16.gmra.mxu0 %v224
  %v384 = vpop.f32.mrf.mxu0
  %v385 = vadd.f32 0.0, %v384
  %v386 = vpop.f32.mrf.mxu0
  %v387 = vpop.f32.mrf.mxu0
  %v388 = vadd.f32 0.0, %v387
  %v389 = vpop.f32.mrf.mxu0
  %390 = vmatprep.mubr.bf16.mxu0 0
  %391 = vmatmul.mubr.bf16.gmra.mxu0 %v225
  %v392 = vpop.f32.mrf.mxu0
  %v393 = vadd.f32 0.0, %v392
  %v394 = vpop.f32.mrf.mxu0
  %v395 = vpop.f32.mrf.mxu0
  %v396 = vadd.f32 0.0, %v395
  %v397 = vpop.f32.mrf.mxu0
  %398 = vmatprep.mubr.bf16.mxu0 0
  %399 = vmatmul.mubr.bf16.gmra.mxu0 %v226
  %v400 = vpop.f32.mrf.mxu0
  %v401 = vadd.f32 0.0, %v400
  %v402 = vpop.f32.mrf.mxu0
  %v403 = vpop.f32.mrf.mxu0
  %v404 = vadd.f32 0.0, %v403
  %v405 = vpop.f32.mrf.mxu0
  %406 = vmatprep.mubr.bf16.mxu0 0
  %407 = vmatmul.mubr.bf16.gmra.mxu0 %v227
  %v408 = vpop.f32.mrf.mxu0
  %v409 = vadd.f32 0.0, %v408
  %v410 = vpop.f32.mrf.mxu0
  %v411 = vpop.f32.mrf.mxu0
  %v412 = vadd.f32 0.0, %v411
  %v413 = vpop.f32.mrf.mxu0
  %414 = vmatprep.mubr.bf16.mxu0 0
  %415 = vmatmul.mubr.bf16.gmra.mxu0 %v228
  %v416 = vpop.f32.mrf.mxu0
  %v417 = vadd.f32 0.0, %v416
  %v418 = vpop.f32.mrf.mxu0
  %v419 = vpop.f32.mrf.mxu0
  %v420 = vadd.f32 0.0, %v419
  %v421 = vpop.f32.mrf.mxu0
  %422 = vmatprep.mubr.bf16.mxu0 0
  %423 = vmatmul.mubr.bf16.gmra.mxu0 %v229
  %v424 = vpop.f32.mrf.mxu0
  %v425 = vadd.f32 0.0, %v424
  %v426 = vpop.f32.mrf.mxu0
  %v427 = vpop.f32.mrf.mxu0
  %v428 = vadd.f32 0.0, %v427
  %v429 = vpop.f32.mrf.mxu0
  %430 = vmatprep.mubr.bf16.mxu0 0
  %431 = vmatmul.mubr.bf16.gmra.mxu0 %v230
  %v432 = vpop.f32.mrf.mxu0
  %v433 = vadd.f32 0.0, %v432
  %v434 = vpop.f32.mrf.mxu0
  %v435 = vpop.f32.mrf.mxu0
  %v436 = vadd.f32 0.0, %v435
  %v437 = vpop.f32.mrf.mxu0
  %438 = vmatprep.mubr.bf16.mxu0 0
  %439 = vmatmul.mubr.bf16.gmra.mxu0 %v231
  %v440 = vpop.f32.mrf.mxu0
  %v441 = vadd.f32 0.0, %v440
  %v442 = vpop.f32.mrf.mxu0
  %v443 = vpop.f32.mrf.mxu0
  %v444 = vadd.f32 0.0, %v443
  %v445 = vpop.f32.mrf.mxu0
  %446 = vmatprep.mubr.bf16.mxu0 0
  %447 = vmatmul.mubr.bf16.gmra.mxu0 %v232
  %v448 = vpop.f32.mrf.mxu0
  %v449 = vadd.f32 0.0, %v448
  %v450 = vpop.f32.mrf.mxu0
  %v451 = vpop.f32.mrf.mxu0
  %v452 = vadd.f32 0.0, %v451
  %v453 = vpop.f32.mrf.mxu0
  %454 = vmatprep.mubr.bf16.mxu0 0
  %455 = vmatmul.mubr.bf16.gmra.mxu0 %v233
  %v456 = vpop.f32.mrf.mxu0
  %v457 = vadd.f32 0.0, %v456
  %v458 = vpop.f32.mrf.mxu0
  %v459 = vpop.f32.mrf.mxu0
  %v460 = vadd.f32 0.0, %v459
  %v461 = vpop.f32.mrf.mxu0
  %462 = vmatprep.mubr.bf16.mxu0 0
  %463 = vmatmul.mubr.bf16.gmra.mxu0 %v234
  %v464 = vpop.f32.mrf.mxu0
  %v465 = vadd.f32 0.0, %v464
  %v466 = vpop.f32.mrf.mxu0
  %v467 = vpop.f32.mrf.mxu0
  %v468 = vadd.f32 0.0, %v467
  %v469 = vpop.f32.mrf.mxu0
  %470 = vmatprep.mubr.bf16.mxu0 0
  %471 = vmatmul.mubr.bf16.gmra.mxu0 %v235
  %v472 = vpop.f32.mrf.mxu0
  %v473 = vadd.f32 0.0, %v472
  %v474 = vpop.f32.mrf.mxu0
  %v475 = vpop.f32.mrf.mxu0
  %v476 = vadd.f32 0.0, %v475
  %v477 = vpop.f32.mrf.mxu0
  %478 = vmatprep.mubr.bf16.mxu0 0
  %479 = vmatmul.mubr.bf16.gmra.mxu0 %v236
  %v480 = vpop.f32.mrf.mxu0
  %v481 = vadd.f32 0.0, %v480
  %v482 = vpop.f32.mrf.mxu0
  %v483 = vpop.f32.mrf.mxu0
  %v484 = vadd.f32 0.0, %v483
  %v485 = vpop.f32.mrf.mxu0
  %486 = vmatprep.mubr.bf16.mxu0 0
  %487 = vmatmul.mubr.bf16.gmra.mxu0 %v237
  %v488 = vpop.f32.mrf.mxu0
  %v489 = vadd.f32 0.0, %v488
  %v490 = vpop.f32.mrf.mxu0
  %v491 = vpop.f32.mrf.mxu0
  %v492 = vadd.f32 0.0, %v491
  %v493 = vpop.f32.mrf.mxu0
  %494 = vmatprep.mubr.bf16.mxu0 0
  %495 = vmatmul.mubr.bf16.gmra.mxu0 %v238
  %v496 = vpop.f32.mrf.mxu0
  %v497 = vadd.f32 0.0, %v496
  %v498 = vpop.f32.mrf.mxu0
  %v499 = vpop.f32.mrf.mxu0
  %v500 = vadd.f32 0.0, %v499
  %v501 = vpop.f32.mrf.mxu0
  %502 = vmatprep.mubr.bf16.mxu0 0
  %503 = vmatmul.mubr.bf16.gmra.mxu0 %v239
  %v504 = vpop.f32.mrf.mxu0
  %v505 = vadd.f32 0.0, %v504
  %v506 = vpop.f32.mrf.mxu0
  %v507 = vpop.f32.mrf.mxu0
  %v508 = vadd.f32 0.0, %v507
  %v509 = vpop.f32.mrf.mxu0
  %510 = vmatprep.mubr.bf16.mxu0 0
  %511 = vmatmul.mubr.bf16.gmra.mxu0 %v240
  %v512 = vpop.f32.mrf.mxu0
  %v513 = vadd.f32 0.0, %v512
  %v514 = vpop.f32.mrf.mxu0
  %v515 = vpop.f32.mrf.mxu0
  %v516 = vadd.f32 0.0, %v515
  %v517 = vpop.f32.mrf.mxu0
  %518 = vmatprep.mubr.bf16.mxu0 0
  %519 = vmatmul.mubr.bf16.gmra.mxu0 %v241
  %v520 = vpop.f32.mrf.mxu0
  %v521 = vadd.f32 0.0, %v520
  %v522 = vpop.f32.mrf.mxu0
  %v523 = vpop.f32.mrf.mxu0
  %v524 = vadd.f32 0.0, %v523
  %v525 = vpop.f32.mrf.mxu0
  %526 = vmatprep.mubr.bf16.mxu0 0
  %527 = vmatmul.mubr.bf16.gmra.mxu0 %v242
  %v528 = vpop.f32.mrf.mxu0
  %v529 = vadd.f32 0.0, %v528
  %v530 = vpop.f32.mrf.mxu0
  %v531 = vpop.f32.mrf.mxu0
  %v532 = vadd.f32 0.0, %v531
  %v533 = vpop.f32.mrf.mxu0
  %534 = vmatprep.mubr.bf16.mxu0 0
  %535 = vmatmul.mubr.bf16.gmra.mxu0 %v243
  %v536 = vpop.f32.mrf.mxu0
  %v537 = vadd.f32 0.0, %v536
  %v538 = vpop.f32.mrf.mxu0
  %v539 = vpop.f32.mrf.mxu0
  %v540 = vadd.f32 0.0, %v539
  %v541 = vpop.f32.mrf.mxu0
  %542 = vmatprep.mubr.bf16.mxu0 0
  %543 = vmatmul.mubr.bf16.gmra.mxu0 %v244
  %v544 = vpop.f32.mrf.mxu0
  %v545 = vadd.f32 0.0, %v544
  %v546 = vpop.f32.mrf.mxu0
  %v547 = vpop.f32.mrf.mxu0
  %v548 = vadd.f32 0.0, %v547
  %v549 = vpop.f32.mrf.mxu0
  %550 = vmatprep.mubr.bf16.mxu0 0
  %551 = vmatmul.mubr.bf16.gmra.mxu0 %v245
  %v552 = vpop.f32.mrf.mxu0
  %v553 = vadd.f32 0.0, %v552
  %v554 = vpop.f32.mrf.mxu0
  %v555 = vpop.f32.mrf.mxu0
  %v556 = vadd.f32 0.0, %v555
  %v557 = vpop.f32.mrf.mxu0
  %558 = vmatprep.mubr.bf16.mxu0 0
  %559 = vmatmul.mubr.bf16.gmra.mxu0 %v246
  %v560 = vpop.f32.mrf.mxu0
  %v561 = vadd.f32 0.0, %v560
  %v562 = vpop.f32.mrf.mxu0
  %v563 = vpop.f32.mrf.mxu0
  %v564 = vadd.f32 0.0, %v563
  %v565 = vpop.f32.mrf.mxu0
  %566 = vmatprep.mubr.bf16.mxu0 0
  %567 = vmatmul.mubr.bf16.gmra.mxu0 %v247
  %v568 = vpop.f32.mrf.mxu0
  %v569 = vadd.f32 0.0, %v568
  %v570 = vpop.f32.mrf.mxu0
  %v571 = vpop.f32.mrf.mxu0
  %v572 = vadd.f32 0.0, %v571
  %v573 = vpop.f32.mrf.mxu0
  %574 = vmatprep.mubr.bf16.mxu0 0
  %575 = vmatmul.mubr.bf16.gmra.mxu0 %v248
  %v576 = vpop.f32.mrf.mxu0
  %v577 = vadd.f32 0.0, %v576
  %v578 = vpop.f32.mrf.mxu0
  %v579 = vpop.f32.mrf.mxu0
  %v580 = vadd.f32 0.0, %v579
  %v581 = vpop.f32.mrf.mxu0
  %582 = vmatprep.mubr.bf16.mxu0 0
  %583 = vmatmul.mubr.bf16.gmra.mxu0 %v249
  %v584 = vpop.f32.mrf.mxu0
  %v585 = vadd.f32 0.0, %v584
  %v586 = vpop.f32.mrf.mxu0
  %v587 = vpop.f32.mrf.mxu0
  %v588 = vadd.f32 0.0, %v587
  %v589 = vpop.f32.mrf.mxu0
  %590 = vmatprep.mubr.bf16.mxu0 0
  %591 = vmatmul.mubr.bf16.gmra.mxu0 %v250
  %v592 = vpop.f32.mrf.mxu0
  %v593 = vadd.f32 0.0, %v592
  %v594 = vpop.f32.mrf.mxu0
  %v595 = vpop.f32.mrf.mxu0
  %v596 = vadd.f32 0.0, %v595
  %v597 = vpop.f32.mrf.mxu0
  %598 = vmatprep.mubr.bf16.mxu0 0
  %599 = vmatmul.mubr.bf16.gmra.mxu0 %v251
  %v600 = vpop.f32.mrf.mxu0
  %v601 = vadd.f32 0.0, %v600
  %v602 = vpop.f32.mrf.mxu0
  %v603 = vpop.f32.mrf.mxu0
  %v604 = vadd.f32 0.0, %v603
  %v605 = vpop.f32.mrf.mxu0
  %606 = vmatprep.mubr.bf16.mxu0 0
  %607 = vmatmul.mubr.bf16.gmra.mxu0 %v252
  %v608 = vpop.f32.mrf.mxu0
  %v609 = vadd.f32 0.0, %v608
  %v610 = vpop.f32.mrf.mxu0
  %v611 = vpop.f32.mrf.mxu0
  %v612 = vadd.f32 0.0, %v611
  %v613 = vpop.f32.mrf.mxu0
  %614 = vmatprep.mubr.bf16.mxu0 0
  %615 = vmatmul.mubr.bf16.gmra.mxu0 %v253
  %v616 = vpop.f32.mrf.mxu0
  %v617 = vadd.f32 0.0, %v616
  %v618 = vpop.f32.mrf.mxu0
  %v619 = vpop.f32.mrf.mxu0
  %v620 = vadd.f32 0.0, %v619
  %v621 = vpop.f32.mrf.mxu0
  %622 = vdwg.mxu0
  %v623 = vpack.c.bf16 %v372, %v369
  %v624 = vpack.c.bf16 %v380, %v377
  %v625 = vpack.c.bf16 %v388, %v385
  %v626 = vpack.c.bf16 %v396, %v393
  %v627 = vpack.c.bf16 %v404, %v401
  %v628 = vpack.c.bf16 %v412, %v409
  %v629 = vpack.c.bf16 %v420, %v417
  %v630 = vpack.c.bf16 %v428, %v425
  %v631 = vpack.c.bf16 %v436, %v433
  %v632 = vpack.c.bf16 %v444, %v441
  %v633 = vpack.c.bf16 %v452, %v449
  %v634 = vpack.c.bf16 %v460, %v457
  %v635 = vpack.c.bf16 %v468, %v465
  %v636 = vpack.c.bf16 %v476, %v473
  %v637 = vpack.c.bf16 %v484, %v481
  %v638 = vpack.c.bf16 %v492, %v489
  %v639 = vpack.c.bf16 %v500, %v497
  %v640 = vpack.c.bf16 %v508, %v505
  %v641 = vpack.c.bf16 %v516, %v513
  %v642 = vpack.c.bf16 %v524, %v521
  %v643 = vpack.c.bf16 %v532, %v529
  %v644 = vpack.c.bf16 %v540, %v537
  %v645 = vpack.c.bf16 %v548, %v545
  %v646 = vpack.c.bf16 %v556, %v553
  %v647 = vpack.c.bf16 %v564, %v561
  %v648 = vpack.c.bf16 %v572, %v569
  %v649 = vpack.c.bf16 %v580, %v577
  %v650 = vpack.c.bf16 %v588, %v585
  %v651 = vpack.c.bf16 %v596, %v593
  %v652 = vpack.c.bf16 %v604, %v601
  %v653 = vpack.c.bf16 %v612, %v609
  %v654 = vpack.c.bf16 %v620, %v617
  %v687 = vunpack.c.l.b16 %v623
  %v688 = vunpack.c.h.b16 %v623
  %v689 = vunpack.c.l.b16 %v624
  %v690 = vunpack.c.h.b16 %v624
  %v691 = vunpack.c.l.b16 %v625
  %v692 = vunpack.c.h.b16 %v625
  %v693 = vunpack.c.l.b16 %v626
  %v694 = vunpack.c.h.b16 %v626
  %v695 = vunpack.c.l.b16 %v627
  %v696 = vunpack.c.h.b16 %v627
  %v697 = vunpack.c.l.b16 %v628
  %v698 = vunpack.c.h.b16 %v628
  %v699 = vunpack.c.l.b16 %v629
  %v700 = vunpack.c.h.b16 %v629
  %v701 = vunpack.c.l.b16 %v630
  %v702 = vunpack.c.h.b16 %v630
  %v703 = vunpack.c.l.b16 %v631
  %v704 = vunpack.c.h.b16 %v631
  %v705 = vunpack.c.l.b16 %v632
  %v706 = vunpack.c.h.b16 %v632
  %v707 = vunpack.c.l.b16 %v633
  %v708 = vunpack.c.h.b16 %v633
  %v709 = vunpack.c.l.b16 %v634
  %v710 = vunpack.c.h.b16 %v634
  %v711 = vunpack.c.l.b16 %v635
  %v712 = vunpack.c.h.b16 %v635
  %v713 = vunpack.c.l.b16 %v636
  %v714 = vunpack.c.h.b16 %v636
  %v715 = vunpack.c.l.b16 %v637
  %v716 = vunpack.c.h.b16 %v637
  %v717 = vunpack.c.l.b16 %v638
  %v718 = vunpack.c.h.b16 %v638
  %v719 = vunpack.c.l.b16 %v639
  %v720 = vunpack.c.h.b16 %v639
  %v721 = vunpack.c.l.b16 %v640
  %v722 = vunpack.c.h.b16 %v640
  %v723 = vunpack.c.l.b16 %v641
  %v724 = vunpack.c.h.b16 %v641
  %v725 = vunpack.c.l.b16 %v642
  %v726 = vunpack.c.h.b16 %v642
  %v727 = vunpack.c.l.b16 %v643
  %v728 = vunpack.c.h.b16 %v643
  %v729 = vunpack.c.l.b16 %v644
  %v730 = vunpack.c.h.b16 %v644
  %v731 = vunpack.c.l.b16 %v645
  %v732 = vunpack.c.h.b16 %v645
  %v733 = vunpack.c.l.b16 %v646
  %v734 = vunpack.c.h.b16 %v646
  %v735 = vunpack.c.l.b16 %v647
  %v736 = vunpack.c.h.b16 %v647
  %v737 = vunpack.c.l.b16 %v648
  %v738 = vunpack.c.h.b16 %v648
  %v739 = vunpack.c.l.b16 %v649
  %v740 = vunpack.c.h.b16 %v649
  %v741 = vunpack.c.l.b16 %v650
  %v742 = vunpack.c.h.b16 %v650
  %v743 = vunpack.c.l.b16 %v651
  %v744 = vunpack.c.h.b16 %v651
  %v745 = vunpack.c.l.b16 %v652
  %v746 = vunpack.c.h.b16 %v652
  %v747 = vunpack.c.l.b16 %v653
  %v748 = vunpack.c.h.b16 %v653
  %v749 = vunpack.c.l.b16 %v654
  %v750 = vunpack.c.h.b16 %v654
  %v751 = vpack.c.b16 %v687, %v687
  %v752 = vpack.c.b16 %v688, %v688
  %v753 = vpack.c.b16 %v689, %v689
  %v754 = vpack.c.b16 %v690, %v690
  %v755 = vpack.c.b16 %v691, %v691
  %v756 = vpack.c.b16 %v692, %v692
  %v757 = vpack.c.b16 %v693, %v693
  %v758 = vpack.c.b16 %v694, %v694
  %v759 = vpack.c.b16 %v695, %v695
  %v760 = vpack.c.b16 %v696, %v696
  %v761 = vpack.c.b16 %v697, %v697
  %v762 = vpack.c.b16 %v698, %v698
  %v763 = vpack.c.b16 %v699, %v699
  %v764 = vpack.c.b16 %v700, %v700
  %v765 = vpack.c.b16 %v701, %v701
  %v766 = vpack.c.b16 %v702, %v702
  %v767 = vpack.c.b16 %v703, %v703
  %v768 = vpack.c.b16 %v704, %v704
  %v769 = vpack.c.b16 %v705, %v705
  %v770 = vpack.c.b16 %v706, %v706
  %v771 = vpack.c.b16 %v707, %v707
  %v772 = vpack.c.b16 %v708, %v708
  %v773 = vpack.c.b16 %v709, %v709
  %v774 = vpack.c.b16 %v710, %v710
  %v775 = vpack.c.b16 %v711, %v711
  %v776 = vpack.c.b16 %v712, %v712
  %v777 = vpack.c.b16 %v713, %v713
  %v778 = vpack.c.b16 %v714, %v714
  %v779 = vpack.c.b16 %v715, %v715
  %v780 = vpack.c.b16 %v716, %v716
  %v781 = vpack.c.b16 %v717, %v717
  %v782 = vpack.c.b16 %v718, %v718
  %v783 = vpack.c.b16 %v719, %v719
  %v784 = vpack.c.b16 %v720, %v720
  %v785 = vpack.c.b16 %v721, %v721
  %v786 = vpack.c.b16 %v722, %v722
  %v787 = vpack.c.b16 %v723, %v723
  %v788 = vpack.c.b16 %v724, %v724
  %v789 = vpack.c.b16 %v725, %v725
  %v790 = vpack.c.b16 %v726, %v726
  %v791 = vpack.c.b16 %v727, %v727
  %v792 = vpack.c.b16 %v728, %v728
  %v793 = vpack.c.b16 %v729, %v729
  %v794 = vpack.c.b16 %v730, %v730
  %v795 = vpack.c.b16 %v731, %v731
  %v796 = vpack.c.b16 %v732, %v732
  %v797 = vpack.c.b16 %v733, %v733
  %v798 = vpack.c.b16 %v734, %v734
  %v799 = vpack.c.b16 %v735, %v735
  %v800 = vpack.c.b16 %v736, %v736
  %v801 = vpack.c.b16 %v737, %v737
  %v802 = vpack.c.b16 %v738, %v738
  %v803 = vpack.c.b16 %v739, %v739
  %v804 = vpack.c.b16 %v740, %v740
  %v805 = vpack.c.b16 %v741, %v741
  %v806 = vpack.c.b16 %v742, %v742
  %v807 = vpack.c.b16 %v743, %v743
  %v808 = vpack.c.b16 %v744, %v744
  %v809 = vpack.c.b16 %v745, %v745
  %v810 = vpack.c.b16 %v746, %v746
  %v811 = vpack.c.b16 %v747, %v747
  %v812 = vpack.c.b16 %v748, %v748
  %v813 = vpack.c.b16 %v749, %v749
  %v814 = vpack.c.b16 %v750, %v750
  %879 = vst [vmem:[%s2] sm:$0xf] %v751
  %880 = vst [vmem:[%s2 + $0x4] sm:$0xf] %v752
  %881 = vst [vmem:[%s2 + $0x8] sm:$0xf] %v753
  %882 = vst [vmem:[%s2 + $0xc] sm:$0xf] %v754
  %883 = vst [vmem:[%s2 + $0x10] sm:$0xf] %v755
  %884 = vst [vmem:[%s2 + $0x14] sm:$0xf] %v756
  %885 = vst [vmem:[%s2 + $0x18] sm:$0xf] %v757
  %886 = vst [vmem:[%s2 + $0x1c] sm:$0xf] %v758
  %887 = vst [vmem:[%s2 + $0x20] sm:$0xf] %v759
  %888 = vst [vmem:[%s2 + $0x24] sm:$0xf] %v760
  %889 = vst [vmem:[%s2 + $0x28] sm:$0xf] %v761
  %890 = vst [vmem:[%s2 + $0x2c] sm:$0xf] %v762
  %891 = vst [vmem:[%s2 + $0x30] sm:$0xf] %v763
  %892 = vst [vmem:[%s2 + $0x34] sm:$0xf] %v764
  %893 = vst [vmem:[%s2 + $0x38] sm:$0xf] %v765
  %894 = vst [vmem:[%s2 + $0x3c] sm:$0xf] %v766
  %895 = vst [vmem:[%s2 + $0x40] sm:$0xf] %v767
  %896 = vst [vmem:[%s2 + $0x44] sm:$0xf] %v768
  %897 = vst [vmem:[%s2 + $0x48] sm:$0xf] %v769
  %898 = vst [vmem:[%s2 + $0x4c] sm:$0xf] %v770
  %899 = vst [vmem:[%s2 + $0x50] sm:$0xf] %v771
  %900 = vst [vmem:[%s2 + $0x54] sm:$0xf] %v772
  %901 = vst [vmem:[%s2 + $0x58] sm:$0xf] %v773
  %902 = vst [vmem:[%s2 + $0x5c] sm:$0xf] %v774
  %903 = vst [vmem:[%s2 + $0x60] sm:$0xf] %v775
  %904 = vst [vmem:[%s2 + $0x64] sm:$0xf] %v776
  %905 = vst [vmem:[%s2 + $0x68] sm:$0xf] %v777
  %906 = vst [vmem:[%s2 + $0x6c] sm:$0xf] %v778
  %907 = vst [vmem:[%s2 + $0x70] sm:$0xf] %v779
  %908 = vst [vmem:[%s2 + $0x74] sm:$0xf] %v780
  %909 = vst [vmem:[%s2 + $0x78] sm:$0xf] %v781
  %910 = vst [vmem:[%s2 + $0x7c] sm:$0xf] %v782
  %911 = vst [vmem:[%s2 + $0x80] sm:$0xf] %v783
  %912 = vst [vmem:[%s2 + $0x84] sm:$0xf] %v784
  %913 = vst [vmem:[%s2 + $0x88] sm:$0xf] %v785
  %914 = vst [vmem:[%s2 + $0x8c] sm:$0xf] %v786
  %915 = vst [vmem:[%s2 + $0x90] sm:$0xf] %v787
  %916 = vst [vmem:[%s2 + $0x94] sm:$0xf] %v788
  %917 = vst [vmem:[%s2 + $0x98] sm:$0xf] %v789
  %918 = vst [vmem:[%s2 + $0x9c] sm:$0xf] %v790
  %919 = vst [vmem:[%s2 + $0xa0] sm:$0xf] %v791
  %920 = vst [vmem:[%s2 + $0xa4] sm:$0xf] %v792
  %921 = vst [vmem:[%s2 + $0xa8] sm:$0xf] %v793
  %922 = vst [vmem:[%s2 + $0xac] sm:$0xf] %v794
  %923 = vst [vmem:[%s2 + $0xb0] sm:$0xf] %v795
  %924 = vst [vmem:[%s2 + $0xb4] sm:$0xf] %v796
  %925 = vst [vmem:[%s2 + $0xb8] sm:$0xf] %v797
  %926 = vst [vmem:[%s2 + $0xbc] sm:$0xf] %v798
  %927 = vst [vmem:[%s2 + $0xc0] sm:$0xf] %v799
  %928 = vst [vmem:[%s2 + $0xc4] sm:$0xf] %v800
  %929 = vst [vmem:[%s2 + $0xc8] sm:$0xf] %v801
  %930 = vst [vmem:[%s2 + $0xcc] sm:$0xf] %v802
  %931 = vst [vmem:[%s2 + $0xd0] sm:$0xf] %v803
  %932 = vst [vmem:[%s2 + $0xd4] sm:$0xf] %v804
  %933 = vst [vmem:[%s2 + $0xd8] sm:$0xf] %v805
  %934 = vst [vmem:[%s2 + $0xdc] sm:$0xf] %v806
  %935 = vst [vmem:[%s2 + $0xe0] sm:$0xf] %v807
  %936 = vst [vmem:[%s2 + $0xe4] sm:$0xf] %v808
  %937 = vst [vmem:[%s2 + $0xe8] sm:$0xf] %v809
  %938 = vst [vmem:[%s2 + $0xec] sm:$0xf] %v810
  %939 = vst [vmem:[%s2 + $0xf0] sm:$0xf] %v811
  %940 = vst [vmem:[%s2 + $0xf4] sm:$0xf] %v812
  %941 = vst [vmem:[%s2 + $0xf8] sm:$0xf] %v813
  %942 = vst [vmem:[%s2 + $0xfc] sm:$0xf] %v814
  %v943 = vadd.f32 %v369, %v372
  %v944 = vadd.f32 %v943, %v377
  %v945 = vadd.f32 %v944, %v380
  %v946 = vadd.f32 %v945, %v385
  %v947 = vadd.f32 %v946, %v388
  %v948 = vadd.f32 %v947, %v393
  %v949 = vadd.f32 %v948, %v396
  %v950 = vadd.f32 %v949, %v401
  %v951 = vadd.f32 %v950, %v404
  %v952 = vadd.f32 %v951, %v409
  %v953 = vadd.f32 %v952, %v412
  %v954 = vadd.f32 %v953, %v417
  %v955 = vadd.f32 %v954, %v420
  %v956 = vadd.f32 %v955, %v425
  %v957 = vadd.f32 %v956, %v428
  %v958 = vadd.f32 %v957, %v433
  %v959 = vadd.f32 %v958, %v436
  %v960 = vadd.f32 %v959, %v441
  %v961 = vadd.f32 %v960, %v444
  %v962 = vadd.f32 %v961, %v449
  %v963 = vadd.f32 %v962, %v452
  %v964 = vadd.f32 %v963, %v457
  %v965 = vadd.f32 %v964, %v460
  %v966 = vadd.f32 %v965, %v465
  %v967 = vadd.f32 %v966, %v468
  %v968 = vadd.f32 %v967, %v473
  %v969 = vadd.f32 %v968, %v476
  %v970 = vadd.f32 %v969, %v481
  %v971 = vadd.f32 %v970, %v484
  %v972 = vadd.f32 %v971, %v489
  %v973 = vadd.f32 %v972, %v492
  %v974 = vadd.f32 %v973, %v497
  %v975 = vadd.f32 %v974, %v500
  %v976 = vadd.f32 %v975, %v505
  %v977 = vadd.f32 %v976, %v508
  %v978 = vadd.f32 %v977, %v513
  %v979 = vadd.f32 %v978, %v516
  %v980 = vadd.f32 %v979, %v521
  %v981 = vadd.f32 %v980, %v524
  %v982 = vadd.f32 %v981, %v529
  %v983 = vadd.f32 %v982, %v532
  %v984 = vadd.f32 %v983, %v537
  %v985 = vadd.f32 %v984, %v540
  %v986 = vadd.f32 %v985, %v545
  %v987 = vadd.f32 %v986, %v548
  %v988 = vadd.f32 %v987, %v553
  %v989 = vadd.f32 %v988, %v556
  %v990 = vadd.f32 %v989, %v561
  %v991 = vadd.f32 %v990, %v564
  %v992 = vadd.f32 %v991, %v569
  %v993 = vadd.f32 %v992, %v572
  %v994 = vadd.f32 %v993, %v577
  %v995 = vadd.f32 %v994, %v580
  %v996 = vadd.f32 %v995, %v585
  %v997 = vadd.f32 %v996, %v588
  %v998 = vadd.f32 %v997, %v593
  %v999 = vadd.f32 %v998, %v596
  %v1000 = vadd.f32 %v999, %v601
  %v1001 = vadd.f32 %v1000, %v604
  %v1002 = vadd.f32 %v1001, %v609
  %v1003 = vadd.f32 %v1002, %v612
  %v1004 = vadd.f32 %v1003, %v617
  %v1005 = vadd.f32 %v1004, %v620
  %v1006 = vrot.slane %v1005, 4
  %v1007 = vadd.f32 %v1005, %v1006
  %v1008 = vrot.slane %v1007, 2
  %v1009 = vadd.f32 %v1007, %v1008
  %v1010 = vrot.slane %v1009, 1
  %v1011 = vadd.f32 %v1009, %v1010
  %v1012 = vmul.f32 %v369, %v369
  %v1013 = vmul.f32 %v372, %v372
  %v1014 = vmul.f32 %v377, %v377
  %v1015 = vmul.f32 %v380, %v380
  %v1016 = vmul.f32 %v385, %v385
  %v1017 = vmul.f32 %v388, %v388
  %v1018 = vmul.f32 %v393, %v393
  %v1019 = vmul.f32 %v396, %v396
  %v1020 = vmul.f32 %v401, %v401
  %v1021 = vmul.f32 %v404, %v404
  %v1022 = vmul.f32 %v409, %v409
  %v1023 = vmul.f32 %v412, %v412
  %v1024 = vmul.f32 %v417, %v417
  %v1025 = vmul.f32 %v420, %v420
  %v1026 = vmul.f32 %v425, %v425
  %v1027 = vmul.f32 %v428, %v428
  %v1028 = vmul.f32 %v433, %v433
  %v1029 = vmul.f32 %v436, %v436
  %v1030 = vmul.f32 %v441, %v441
  %v1031 = vmul.f32 %v444, %v444
  %v1032 = vmul.f32 %v449, %v449
  %v1033 = vmul.f32 %v452, %v452
  %v1034 = vmul.f32 %v457, %v457
  %v1035 = vmul.f32 %v460, %v460
  %v1036 = vmul.f32 %v465, %v465
  %v1037 = vmul.f32 %v468, %v468
  %v1038 = vmul.f32 %v473, %v473
  %v1039 = vmul.f32 %v476, %v476
  %v1040 = vmul.f32 %v481, %v481
  %v1041 = vmul.f32 %v484, %v484
  %v1042 = vmul.f32 %v489, %v489
  %v1043 = vmul.f32 %v492, %v492
  %v1044 = vmul.f32 %v497, %v497
  %v1045 = vmul.f32 %v500, %v500
  %v1046 = vmul.f32 %v505, %v505
  %v1047 = vmul.f32 %v508, %v508
  %v1048 = vmul.f32 %v513, %v513
  %v1049 = vmul.f32 %v516, %v516
  %v1050 = vmul.f32 %v521, %v521
  %v1051 = vmul.f32 %v524, %v524
  %v1052 = vmul.f32 %v529, %v529
  %v1053 = vmul.f32 %v532, %v532
  %v1054 = vmul.f32 %v537, %v537
  %v1055 = vmul.f32 %v540, %v540
  %v1056 = vmul.f32 %v545, %v545
  %v1057 = vmul.f32 %v548, %v548
  %v1058 = vmul.f32 %v553, %v553
  %v1059 = vmul.f32 %v556, %v556
  %v1060 = vmul.f32 %v561, %v561
  %v1061 = vmul.f32 %v564, %v564
  %v1062 = vmul.f32 %v569, %v569
  %v1063 = vmul.f32 %v572, %v572
  %v1064 = vmul.f32 %v577, %v577
  %v1065 = vmul.f32 %v580, %v580
  %v1066 = vmul.f32 %v585, %v585
  %v1067 = vmul.f32 %v588, %v588
  %v1068 = vmul.f32 %v593, %v593
  %v1069 = vmul.f32 %v596, %v596
  %v1070 = vmul.f32 %v601, %v601
  %v1071 = vmul.f32 %v604, %v604
  %v1072 = vmul.f32 %v609, %v609
  %v1073 = vmul.f32 %v612, %v612
  %v1074 = vmul.f32 %v617, %v617
  %v1075 = vmul.f32 %v620, %v620
  %v1076 = vadd.f32 %v1012, %v1013
  %v1077 = vadd.f32 %v1076, %v1014
  %v1078 = vadd.f32 %v1077, %v1015
  %v1079 = vadd.f32 %v1078, %v1016
  %v1080 = vadd.f32 %v1079, %v1017
  %v1081 = vadd.f32 %v1080, %v1018
  %v1082 = vadd.f32 %v1081, %v1019
  %v1083 = vadd.f32 %v1082, %v1020
  %v1084 = vadd.f32 %v1083, %v1021
  %v1085 = vadd.f32 %v1084, %v1022
  %v1086 = vadd.f32 %v1085, %v1023
  %v1087 = vadd.f32 %v1086, %v1024
  %v1088 = vadd.f32 %v1087, %v1025
  %v1089 = vadd.f32 %v1088, %v1026
  %v1090 = vadd.f32 %v1089, %v1027
  %v1091 = vadd.f32 %v1090, %v1028
  %v1092 = vadd.f32 %v1091, %v1029
  %v1093 = vadd.f32 %v1092, %v1030
  %v1094 = vadd.f32 %v1093, %v1031
  %v1095 = vadd.f32 %v1094, %v1032
  %v1096 = vadd.f32 %v1095, %v1033
  %v1097 = vadd.f32 %v1096, %v1034
  %v1098 = vadd.f32 %v1097, %v1035
  %v1099 = vadd.f32 %v1098, %v1036
  %v1100 = vadd.f32 %v1099, %v1037
  %v1101 = vadd.f32 %v1100, %v1038
  %v1102 = vadd.f32 %v1101, %v1039
  %v1103 = vadd.f32 %v1102, %v1040
  %v1104 = vadd.f32 %v1103, %v1041
  %v1105 = vadd.f32 %v1104, %v1042
  %v1106 = vadd.f32 %v1105, %v1043
  %v1107 = vadd.f32 %v1106, %v1044
  %v1108 = vadd.f32 %v1107, %v1045
  %v1109 = vadd.f32 %v1108, %v1046
  %v1110 = vadd.f32 %v1109, %v1047
  %v1111 = vadd.f32 %v1110, %v1048
  %v1112 = vadd.f32 %v1111, %v1049
  %v1113 = vadd.f32 %v1112, %v1050
  %v1114 = vadd.f32 %v1113, %v1051
  %v1115 = vadd.f32 %v1114, %v1052
  %v1116 = vadd.f32 %v1115, %v1053
  %v1117 = vadd.f32 %v1116, %v1054
  %v1118 = vadd.f32 %v1117, %v1055
  %v1119 = vadd.f32 %v1118, %v1056
  %v1120 = vadd.f32 %v1119, %v1057
  %v1121 = vadd.f32 %v1120, %v1058
  %v1122 = vadd.f32 %v1121, %v1059
  %v1123 = vadd.f32 %v1122, %v1060
  %v1124 = vadd.f32 %v1123, %v1061
  %v1125 = vadd.f32 %v1124, %v1062
  %v1126 = vadd.f32 %v1125, %v1063
  %v1127 = vadd.f32 %v1126, %v1064
  %v1128 = vadd.f32 %v1127, %v1065
  %v1129 = vadd.f32 %v1128, %v1066
  %v1130 = vadd.f32 %v1129, %v1067
  %v1131 = vadd.f32 %v1130, %v1068
  %v1132 = vadd.f32 %v1131, %v1069
  %v1133 = vadd.f32 %v1132, %v1070
  %v1134 = vadd.f32 %v1133, %v1071
  %v1135 = vadd.f32 %v1134, %v1072
  %v1136 = vadd.f32 %v1135, %v1073
  %v1137 = vadd.f32 %v1136, %v1074
  %v1138 = vadd.f32 %v1137, %v1075
  %v1139 = vrot.slane %v1138, 4
  %v1140 = vadd.f32 %v1138, %v1139
  %v1141 = vrot.slane %v1140, 2
  %v1142 = vadd.f32 %v1140, %v1141
  %v1143 = vrot.slane %v1142, 1
  %v1144 = vadd.f32 %v1142, %v1143
  %vm1145 = vcmask 1040384
  %v1146 = vsel %vm1145, %v1011, %v1144
  %1147 = vst [vmem:[%s3] sm:$0x3] %v1146
  // Predicated region
  $region10: #{conv_bn_silu.2} parent=0 // pred_check
    _
  $region11: #{conv_bn_silu.2} parent=0 // pred_check_branch
    %1149 = sbr.rel (0) target = $region13
  $region12: #{conv_bn_silu.2} parent=0 // pred_region
    _
  $region13: #{conv_bn_silu.2} parent=0 // pred_fallthru
    _
  // Predicated region
  $region14: #{conv_bn_silu.2} parent=0 // pred_check
    _
  $region15: #{conv_bn_silu.2} parent=0 // pred_check_branch
    %1151 = sbr.rel (0) target = $region17
  $region16: #{conv_bn_silu.2} parent=0 // pred_region
    _
  $region17: #{conv_bn_silu.2} parent=0 // pred_fallthru
    _
  // Predicated region
  $region18: #{conv_bn_silu.2} parent=0 // pred_check
    _
  $region19: #{conv_bn_silu.2} parent=0 // pred_check_branch
    %1153 = sbr.rel (0) target = $region21
  $region20: #{conv_bn_silu.2} parent=0 // pred_region
    _
  $region21: #{conv_bn_silu.2} parent=0 // pred_fallthru
    _
  // Predicated region
  $region22: #{conv_bn_silu.2} parent=0 // pred_check
    _
  $region23: #{conv_bn_silu.2} parent=0 // pred_check_branch
    %1155 = sbr.rel (0) target = $region25
  $region24: #{conv_bn_silu.2} parent=0 // pred_region
    _
  $region25: #{conv_bn_silu.2} parent=0 // pred_fallthru
    _

</llo_original>
